<compile_context>
chip_gen: v6e
topology: v6e:2x2x1
jax: 0.10.0
libtpu: 0.0.40
codegen_flags: <defaults>
</compile_context>

<pallas_src>
import functools

import jax
import jax.numpy as jnp
import numpy as np
from jax import lax
from jax.experimental import pallas as pl
from jax.experimental.pallas import tpu as pltpu

# ---- packed-weight layout: single (112, 160) ref -> one weight DMA ----
_KOFF = (0, 3, 8)      # slab-row offset of each image's 3 channels (image 3 is 8-aligned)
_CONV_K = 144          # fused-conv contraction size: 9 taps x 16 slab rows
_BIAS_COL = 144        # conv bias column (read separately, NOT part of the matmul K)
_FC1_COL = 145         # fc1^T (96, 6): SE Linear(96->6, no bias), transposed
_FC2_COL = 151         # fc2   (96, 6): SE Linear(6->96, no bias)
_WL_ROW = 96           # weight_layer rows: wl_w (9, 96) at cols 0:96, wl_b at col 96
_W_ROWS, _W_COLS = 112, 160


# ----------------------------- Pallas kernel -------------------------------
def compositor_kernel(x1_ref, x2_ref, x3_ref, w_ref, out_ref,
                      slab_ref, patch_ref, feat_ref, *, B, H, W):
    HW = H * W
    L = B * HW
    w_shift = W.bit_length() - 1          # H, W are powers of two (asserted in wrapper)

    # ---- 1. in-kernel input assembly: (16, L) channel slab, lanes = b*HW + y*W + x.
    # rows 0-2 = x1 RGB, 3-5 = x2 RGB, 8-10 = x3 RGB, everything else stays zero
    # (those zero rows pair with zero wf columns, so no garbage ever reaches the MXU).
    slab_ref[...] = jnp.zeros_like(slab_ref)
    for k, xr in enumerate((x1_ref, x2_ref, x3_ref)):
        r = _KOFF[k]
        for b in range(B):
            slab_ref[r:r + 3, b * HW:(b + 1) * HW] = xr[b]
    slab = slab_ref[...]                   # (16, L)

    # ---- 2. edge masks hoisted out of the tap loop (computed once at full shape) ----
    col = lax.broadcasted_iota(jnp.int32, (16, L), 1)
    xx = col & (W - 1)
    yy = (col >> w_shift) & (H - 1)
    ymask = {-1: yy >= 1, 0: None, 1: yy < (H - 1)}
    xmask = {-1: xx >= 1, 0: None, 1: xx < (W - 1)}

    # ---- 3. im2col: 9 cyclic lane shifts, one `&` + one select per tap, aligned
    #         16-row stores into the (144, L) patch scratch.
    def shift_lanes(v, d):
        # y[:, l] = v[:, (l + d) mod L]; wrapped lanes are zeroed by the edge masks.
        s = d % L
        if s == 0:
            return v
        return jnp.concatenate([v[:, s:], v[:, :s]], axis=1)

    for t in range(9):
        ky, kx = divmod(t, 3)
        dy, dx = ky - 1, kx - 1
        tap = shift_lanes(slab, dy * W + dx)
        my, mx = ymask[dy], xmask[dx]
        if my is not None and mx is not None:
            valid = my & mx
        elif my is not None:
            valid = my
        else:
            valid = mx
        if valid is not None:
            tap = jnp.where(valid, tap, 0.0)
        patch_ref[t * 16:(t + 1) * 16, :] = tap

    # ---- 4. fused conv1/conv2/conv3 as ONE block-diagonal matmul; bias + LeakyReLU
    #         fused after (no ones-row/bias-column trick).
    conv_w = w_ref[0:96, 0:_CONV_K]                      # (96, 144)
    conv_b = w_ref[0:96, _BIAS_COL:_BIAS_COL + 1]        # (96, 1)
    feat = jnp.dot(conv_w, patch_ref[...],
                   preferred_element_type=jnp.float32)   # (96, L)
    feat = feat + conv_b
    feat = jnp.where(feat > 0, feat, 0.2 * feat)
    feat_ref[...] = feat                                 # keep feat VMEM-resident

    # ---- 5. SE scales for ALL batches up front (GAP from the still-live matmul
    #         result), then apply per-batch scale in place on the VMEM feat. ----
    fc1t = w_ref[0:96, _FC1_COL:_FC1_COL + 6]            # (96, 6)
    fc2 = w_ref[0:96, _FC2_COL:_FC2_COL + 6]             # (96, 6)
    inv_hw = 1.0 / HW
    scales = []
    for b in range(B):                                   # B is tiny & static
        y = jnp.sum(feat[:, b * HW:(b + 1) * HW], axis=1, keepdims=True) * inv_hw  # (96,1)
        h = jnp.maximum(jnp.sum(fc1t * y, axis=0, keepdims=True), 0.0)             # (1,6)
        s = jax.nn.sigmoid(jnp.sum(fc2 * h, axis=1, keepdims=True))                # (96,1)
        scales.append(s)
    # In-place per-batch scaling streams through VMEM (no (96,L) scale map in vregs).
    for b in range(B):
        lo, hi = b * HW, (b + 1) * HW
        feat_ref[:, lo:hi] = feat_ref[:, lo:hi] * scales[b]

    # ---- 6. de-batched tail: ONE lane-dense 1x1-conv matmul, ONE paired 3-way
    #         softmax, ONE composite over all B*HW lanes. ----
    wl_w = w_ref[_WL_ROW:_WL_ROW + 9, 0:96]              # (9, 96)
    wl_b = w_ref[_WL_ROW:_WL_ROW + 9, 96:97]             # (9, 1)
    wmap = jnp.dot(wl_w, feat_ref[...],
                   preferred_element_type=jnp.float32) + wl_b                      # (9, L)

    wa, wb, wc = wmap[0:3], wmap[3:6], wmap[6:9]
    mx_ = jnp.maximum(jnp.maximum(wa, wb), wc)
    ea = jnp.exp(wa - mx_)
    eb = jnp.exp(wb - mx_)
    ec = jnp.exp(wc - mx_)
    den = ea + eb + ec

    # Re-load the unshifted centers from VMEM (not kept live across the whole kernel).
    x1c = slab_ref[0:3, :]
    x2c = slab_ref[3:6, :]
    x3c = slab_ref[8:11, :]
    res = (x1c * ea + x2c * eb + x3c * ec) / den          # exact divide (accuracy)

    for b in range(B):                                    # (B,3,HW) output layout so the
        out_ref[b] = res[:, b * HW:(b + 1) * HW]          # wrapper reshape is free


# ------------------------------- wrappers ------------------------------------
def pack_params(params):
    """One-time host-side packing of all 10 weight tensors into ONE (112,160) array."""
    w = np.zeros((_W_ROWS, _W_COLS), np.float32)
    for k in range(3):
        cw = np.asarray(params[f"conv{k + 1}_w"], np.float32)   # (32, 3, 3, 3)
        cb = np.asarray(params[f"conv{k + 1}_b"], np.float32)   # (32,)
        for t in range(9):
            ky, kx = divmod(t, 3)
            c0 = 16 * t + _KOFF[k]
            w[32 * k:32 * (k + 1), c0:c0 + 3] = cw[:, :, ky, kx]
        w[32 * k:32 * (k + 1), _BIAS_COL] = cb
    w[0:96, _FC1_COL:_FC1_COL + 6] = np.asarray(params["fc1_w"], np.float32).T
    w[0:96, _FC2_COL:_FC2_COL + 6] = np.asarray(params["fc2_w"], np.float32)
    w[_WL_ROW:_WL_ROW + 9, 0:96] = np.asarray(params["wl_w"], np.float32).reshape(9, 96)
    w[_WL_ROW:_WL_ROW + 9, 96] = np.asarray(params["wl_b"], np.float32)
    return jnp.asarray(w)


@jax.jit
def _compositor_call(x1, x2, x3, w):
    B, C, H, W = x1.shape
    assert C == 3 and (H & (H - 1)) == 0 and (W & (W - 1)) == 0
    HW = H * W
    L = B * HW

    x1f = x1.reshape(B, 3, HW)          # free reshapes only - no XLA data movement
    x2f = x2.reshape(B, 3, HW)
    x3f = x3.reshape(B, 3, HW)

    img_spec = pl.BlockSpec((B, 3, HW), lambda i: (0, 0, 0))
    out = pl.pallas_call(
        functools.partial(compositor_kernel, B=B, H=H, W=W),
        out_shape=jax.ShapeDtypeStruct((B, 3, HW), jnp.float32),
        grid=(1,),
        in_specs=[img_spec, img_spec, img_spec,
                  pl.BlockSpec((_W_ROWS, _W_COLS), lambda i: (0, 0))],
        out_specs=pl.BlockSpec((B, 3, HW), lambda i: (0, 0, 0)),
        scratch_shapes=[pltpu.VMEM((16, L), jnp.float32),    # channel slab
                        pltpu.VMEM((144, L), jnp.float32),   # im2col patch
                        pltpu.VMEM((96, L), jnp.float32)],   # feat (VMEM-resident)
        compiler_params=pltpu.CompilerParams(dimension_semantics=("arbitrary",)),
    )(x1f, x2f, x3f, w)
    return out.reshape(B, 3, H, W)       # free reshape


def make_compositor(params):
    """Packs the weights ONCE and returns a callable (amortizes pack + H2D)."""
    w = pack_params(params)
    def apply(x1, x2, x3):
        return _compositor_call(x1, x2, x3, w)
    return apply


# -------------------------- pure-JAX reference -------------------------------
def reference_forward(inter_R_list, params):
    x1, x2, x3 = inter_R_list

    def conv(x, w, b):
        y = lax.conv_general_dilated(x, w, (1, 1), "SAME",
                                     dimension_numbers=("NCHW", "OIHW", "NCHW"))
        return y + b[None, :, None, None]

    leaky = lambda t: jnp.where(t > 0, t, 0.2 * t)
    f1 = leaky(conv(x1, params["conv1_w"], params["conv1_b"]))
    f2 = leaky(conv(x2, params["conv2_w"], params["conv2_b"]))
    f3 = leaky(conv(x3, params["conv3_w"], params["conv3_b"]))
    feat = jnp.concatenate([f1, f2, f3], axis=1)        # (B, 96, H, W)

    y = feat.mean(axis=(2, 3))                          # (B, 96)
    h = jnp.maximum(y @ params["fc1_w"].T, 0.0)         # (B, 6)
    s = jax.nn.sigmoid(h @ params["fc2_w"].T)           # (B, 96)
    feat = feat * s[:, :, None, None]

    wmap = lax.conv_general_dilated(feat, params["wl_w"], (1, 1), "SAME",
                                    dimension_numbers=("NCHW", "OIHW", "NCHW"))
    wmap = wmap + params["wl_b"][None, :, None, None]   # (B, 9, H, W)

    a, b3, c3 = wmap[:, 0:3], wmap[:, 3:6], wmap[:, 6:9]
    m = jnp.maximum(jnp.maximum(a, b3), c3)
    ea, eb, ec = jnp.exp(a - m), jnp.exp(b3 - m), jnp.exp(c3 - m)
    den = ea + eb + ec
    return x1 * (ea / den) + x2 * (eb / den) + x3 * (ec / den)


# ---------------------------------- main -------------------------------------
if __name__ == "__main__":
    key = jax.random.PRNGKey(0)
    ks = jax.random.split(key, 16)

    B, C, H, W = 2, 3, 16, 16
    x1 = jax.random.normal(ks[0], (B, C, H, W), jnp.float32)
    x2 = jax.random.normal(ks[1], (B, C, H, W), jnp.float32)
    x3 = jax.random.normal(ks[2], (B, C, H, W), jnp.float32)

    params = {
        "conv1_w": jax.random.normal(ks[3], (32, 3, 3, 3), jnp.float32) * 0.1,
        "conv1_b": jax.random.normal(ks[4], (32,), jnp.float32) * 0.1,
        "conv2_w": jax.random.normal(ks[5], (32, 3, 3, 3), jnp.float32) * 0.1,
        "conv2_b": jax.random.normal(ks[6], (32,), jnp.float32) * 0.1,
        "conv3_w": jax.random.normal(ks[7], (32, 3, 3, 3), jnp.float32) * 0.1,
        "conv3_b": jax.random.normal(ks[8], (32,), jnp.float32) * 0.1,
        "fc1_w": jax.random.normal(ks[9], (6, 96), jnp.float32) * 0.1,    # Linear(96->6, no bias)
        "fc2_w": jax.random.normal(ks[10], (96, 6), jnp.float32) * 0.1,   # Linear(6->96, no bias)
        "wl_w": jax.random.normal(ks[11], (9, 96, 1, 1), jnp.float32) * 0.1,
        "wl_b": jax.random.normal(ks[12], (9,), jnp.float32) * 0.1,
    }

    compositor = make_compositor(params)      # weights packed + uploaded ONCE
    out = jax.block_until_ready(compositor(x1, x2, x3))

    ref = jax.block_until_ready(reference_forward([x1, x2, x3], params))
    assert out.shape == (B, C, H, W)
    err = float(jnp.max(jnp.abs(out - ref)))
    assert err < 1e-4, f"max abs err {err}"
    print("KERNEL_OK")
</pallas_src>

<mosaic_0001>
module attributes {stable_mosaic.version = 11 : i64} {
  func.func @compositor_kernel(%arg0: i32, %arg1: memref<2x3x256xf32, #tpu.memory_space<vmem>>, %arg2: memref<2x3x256xf32, #tpu.memory_space<vmem>>, %arg3: memref<2x3x256xf32, #tpu.memory_space<vmem>>, %arg4: memref<112x160xf32, #tpu.memory_space<vmem>>, %arg5: memref<2x3x256xf32, #tpu.memory_space<vmem>>, %arg6: memref<16x512xf32, #tpu.memory_space<vmem>>, %arg7: memref<144x512xf32, #tpu.memory_space<vmem>>, %arg8: memref<96x512xf32, #tpu.memory_space<vmem>>) attributes {dimension_semantics = [#tpu.dimension_semantics<arbitrary>], iteration_bounds = array<i64: 1>, scalar_prefetch = 0 : i64, scratch_operands = 3 : i64, tpu.core_type = #tpu.core_type<tc>, window_params = [{pipeline_mode = #tpu.pipeline_mode<synchronous>, transform_indices = @transform_0, window_bounds = array<i64: 2, 3, 256>}, {pipeline_mode = #tpu.pipeline_mode<synchronous>, transform_indices = @transform_1, window_bounds = array<i64: 2, 3, 256>}, {pipeline_mode = #tpu.pipeline_mode<synchronous>, transform_indices = @transform_2, window_bounds = array<i64: 2, 3, 256>}, {pipeline_mode = #tpu.pipeline_mode<synchronous>, transform_indices = @transform_3, window_bounds = array<i64: 112, 160>}, {pipeline_mode = #tpu.pipeline_mode<synchronous>, transform_indices = @transform_4, window_bounds = array<i64: 2, 3, 256>}]} {
    %cst = arith.constant 0.000000e+00 : f32
    %0 = vector.broadcast %cst : f32 to vector<16x512xf32>
    %c0 = arith.constant 0 : index
    %c0_0 = arith.constant 0 : index
    %1 = vector.load %arg6[%c0, %c0_0] : memref<16x512xf32, #tpu.memory_space<vmem>>, vector<16x512xf32>
    tpu.vector_store %arg6[%c0, %c0_0], %0 {strides = array<i32>} : memref<16x512xf32, #tpu.memory_space<vmem>>, vector<16x512xf32>,
    %c0_1 = arith.constant 0 : index
    %c0_2 = arith.constant 0 : index
    %c0_3 = arith.constant 0 : index
    %2 = vector.load %arg1[%c0_1, %c0_2, %c0_3] : memref<2x3x256xf32, #tpu.memory_space<vmem>>, vector<1x3x256xf32>
    %3 = vector.shape_cast %2 : vector<1x3x256xf32> to vector<3x256xf32>
    %c0_4 = arith.constant 0 : index
    %c0_5 = arith.constant 0 : index
    %4 = vector.load %arg6[%c0_4, %c0_5] : memref<16x512xf32, #tpu.memory_space<vmem>>, vector<3x256xf32>
    tpu.vector_store %arg6[%c0_4, %c0_5], %3 {strides = array<i32>} : memref<16x512xf32, #tpu.memory_space<vmem>>, vector<3x256xf32>,
    %c1 = arith.constant 1 : index
    %c0_6 = arith.constant 0 : index
    %c0_7 = arith.constant 0 : index
    %5 = vector.load %arg1[%c1, %c0_6, %c0_7] : memref<2x3x256xf32, #tpu.memory_space<vmem>>, vector<1x3x256xf32>
    %6 = vector.shape_cast %5 : vector<1x3x256xf32> to vector<3x256xf32>
    %c0_8 = arith.constant 0 : index
    %c256 = arith.constant 256 : index
    %7 = vector.load %arg6[%c0_8, %c256] : memref<16x512xf32, #tpu.memory_space<vmem>>, vector<3x256xf32>
    tpu.vector_store %arg6[%c0_8, %c256], %6 {strides = array<i32>} : memref<16x512xf32, #tpu.memory_space<vmem>>, vector<3x256xf32>,
    %c0_9 = arith.constant 0 : index
    %c0_10 = arith.constant 0 : index
    %c0_11 = arith.constant 0 : index
    %8 = vector.load %arg2[%c0_9, %c0_10, %c0_11] : memref<2x3x256xf32, #tpu.memory_space<vmem>>, vector<1x3x256xf32>
    %9 = vector.shape_cast %8 : vector<1x3x256xf32> to vector<3x256xf32>
    %c3 = arith.constant 3 : index
    %c0_12 = arith.constant 0 : index
    %10 = vector.load %arg6[%c3, %c0_12] : memref<16x512xf32, #tpu.memory_space<vmem>>, vector<3x256xf32>
    tpu.vector_store %arg6[%c3, %c0_12], %9 {strides = array<i32>} : memref<16x512xf32, #tpu.memory_space<vmem>>, vector<3x256xf32>,
    %c1_13 = arith.constant 1 : index
    %c0_14 = arith.constant 0 : index
    %c0_15 = arith.constant 0 : index
    %11 = vector.load %arg2[%c1_13, %c0_14, %c0_15] : memref<2x3x256xf32, #tpu.memory_space<vmem>>, vector<1x3x256xf32>
    %12 = vector.shape_cast %11 : vector<1x3x256xf32> to vector<3x256xf32>
    %c3_16 = arith.constant 3 : index
    %c256_17 = arith.constant 256 : index
    %13 = vector.load %arg6[%c3_16, %c256_17] : memref<16x512xf32, #tpu.memory_space<vmem>>, vector<3x256xf32>
    tpu.vector_store %arg6[%c3_16, %c256_17], %12 {strides = array<i32>} : memref<16x512xf32, #tpu.memory_space<vmem>>, vector<3x256xf32>,
    %c0_18 = arith.constant 0 : index
    %c0_19 = arith.constant 0 : index
    %c0_20 = arith.constant 0 : index
    %14 = vector.load %arg3[%c0_18, %c0_19, %c0_20] : memref<2x3x256xf32, #tpu.memory_space<vmem>>, vector<1x3x256xf32>
    %15 = vector.shape_cast %14 : vector<1x3x256xf32> to vector<3x256xf32>
    %c8 = arith.constant 8 : index
    %c0_21 = arith.constant 0 : index
    %16 = vector.load %arg6[%c8, %c0_21] : memref<16x512xf32, #tpu.memory_space<vmem>>, vector<3x256xf32>
    tpu.vector_store %arg6[%c8, %c0_21], %15 {strides = array<i32>} : memref<16x512xf32, #tpu.memory_space<vmem>>, vector<3x256xf32>,
    %c1_22 = arith.constant 1 : index
    %c0_23 = arith.constant 0 : index
    %c0_24 = arith.constant 0 : index
    %17 = vector.load %arg3[%c1_22, %c0_23, %c0_24] : memref<2x3x256xf32, #tpu.memory_space<vmem>>, vector<1x3x256xf32>
    %18 = vector.shape_cast %17 : vector<1x3x256xf32> to vector<3x256xf32>
    %c8_25 = arith.constant 8 : index
    %c256_26 = arith.constant 256 : index
    %19 = vector.load %arg6[%c8_25, %c256_26] : memref<16x512xf32, #tpu.memory_space<vmem>>, vector<3x256xf32>
    tpu.vector_store %arg6[%c8_25, %c256_26], %18 {strides = array<i32>} : memref<16x512xf32, #tpu.memory_space<vmem>>, vector<3x256xf32>,
    %c0_27 = arith.constant 0 : index
    %c0_28 = arith.constant 0 : index
    %20 = vector.load %arg6[%c0_27, %c0_28] : memref<16x512xf32, #tpu.memory_space<vmem>>, vector<16x512xf32>
    %21 = tpu.iota {dimensions = array<i32: 1>} : vector<16x512xi32>
    %c15_i32 = arith.constant 15 : i32
    %22 = vector.broadcast %c15_i32 : i32 to vector<16x512xi32>
    %23 = arith.andi %21, %22 : vector<16x512xi32>
    %c4_i32 = arith.constant 4 : i32
    %24 = vector.broadcast %c4_i32 : i32 to vector<16x512xi32>
    %25 = arith.shrsi %21, %24 : vector<16x512xi32>
    %c15_i32_29 = arith.constant 15 : i32
    %26 = vector.broadcast %c15_i32_29 : i32 to vector<16x512xi32>
    %27 = arith.andi %25, %26 : vector<16x512xi32>
    %c1_i32 = arith.constant 1 : i32
    %28 = vector.broadcast %c1_i32 : i32 to vector<16x512xi32>
    %29 = arith.cmpi sge, %27, %28 : vector<16x512xi32>
    %c15_i32_30 = arith.constant 15 : i32
    %30 = vector.broadcast %c15_i32_30 : i32 to vector<16x512xi32>
    %31 = arith.cmpi slt, %27, %30 : vector<16x512xi32>
    %c1_i32_31 = arith.constant 1 : i32
    %32 = vector.broadcast %c1_i32_31 : i32 to vector<16x512xi32>
    %33 = arith.cmpi sge, %23, %32 : vector<16x512xi32>
    %c15_i32_32 = arith.constant 15 : i32
    %34 = vector.broadcast %c15_i32_32 : i32 to vector<16x512xi32>
    %35 = arith.cmpi slt, %23, %34 : vector<16x512xi32>
    %36 = vector.extract_strided_slice %20 {offsets = [0, 495], sizes = [16, 17], strides = [1, 1]} : vector<16x512xf32> to vector<16x17xf32>
    %37 = vector.extract_strided_slice %20 {offsets = [0, 0], sizes = [16, 495], strides = [1, 1]} : vector<16x512xf32> to vector<16x495xf32>
    %38 = tpu.concatenate %36, %37 in 1 : vector<16x17xf32>, vector<16x495xf32> -> vector<16x512xf32>
    %39 = arith.andi %29, %33 : vector<16x512xi1>
    %cst_33 = arith.constant 0.000000e+00 : f32
    %40 = vector.broadcast %cst_33 : f32 to vector<16x512xf32>
    %41 = arith.select %39, %38, %40 : vector<16x512xi1>, vector<16x512xf32>
    %c0_34 = arith.constant 0 : index
    %c0_35 = arith.constant 0 : index
    %42 = vector.load %arg7[%c0_34, %c0_35] : memref<144x512xf32, #tpu.memory_space<vmem>>, vector<16x512xf32>
    tpu.vector_store %arg7[%c0_34, %c0_35], %41 {strides = array<i32>} : memref<144x512xf32, #tpu.memory_space<vmem>>, vector<16x512xf32>,
    %43 = vector.extract_strided_slice %20 {offsets = [0, 496], sizes = [16, 16], strides = [1, 1]} : vector<16x512xf32> to vector<16x16xf32>
    %44 = vector.extract_strided_slice %20 {offsets = [0, 0], sizes = [16, 496], strides = [1, 1]} : vector<16x512xf32> to vector<16x496xf32>
    %45 = tpu.concatenate %43, %44 in 1 : vector<16x16xf32>, vector<16x496xf32> -> vector<16x512xf32>
    %cst_36 = arith.constant 0.000000e+00 : f32
    %46 = vector.broadcast %cst_36 : f32 to vector<16x512xf32>
    %47 = arith.select %29, %45, %46 : vector<16x512xi1>, vector<16x512xf32>
    %c16 = arith.constant 16 : index
    %c0_37 = arith.constant 0 : index
    %48 = vector.load %arg7[%c16, %c0_37] : memref<144x512xf32, #tpu.memory_space<vmem>>, vector<16x512xf32>
    tpu.vector_store %arg7[%c16, %c0_37], %47 {strides = array<i32>} : memref<144x512xf32, #tpu.memory_space<vmem>>, vector<16x512xf32>,
    %49 = vector.extract_strided_slice %20 {offsets = [0, 497], sizes = [16, 15], strides = [1, 1]} : vector<16x512xf32> to vector<16x15xf32>
    %50 = vector.extract_strided_slice %20 {offsets = [0, 0], sizes = [16, 497], strides = [1, 1]} : vector<16x512xf32> to vector<16x497xf32>
    %51 = tpu.concatenate %49, %50 in 1 : vector<16x15xf32>, vector<16x497xf32> -> vector<16x512xf32>
    %52 = arith.andi %29, %35 : vector<16x512xi1>
    %cst_38 = arith.constant 0.000000e+00 : f32
    %53 = vector.broadcast %cst_38 : f32 to vector<16x512xf32>
    %54 = arith.select %52, %51, %53 : vector<16x512xi1>, vector<16x512xf32>
    %c32 = arith.constant 32 : index
    %c0_39 = arith.constant 0 : index
    %55 = vector.load %arg7[%c32, %c0_39] : memref<144x512xf32, #tpu.memory_space<vmem>>, vector<16x512xf32>
    tpu.vector_store %arg7[%c32, %c0_39], %54 {strides = array<i32>} : memref<144x512xf32, #tpu.memory_space<vmem>>, vector<16x512xf32>,
    %56 = vector.extract_strided_slice %20 {offsets = [0, 511], sizes = [16, 1], strides = [1, 1]} : vector<16x512xf32> to vector<16x1xf32>
    %57 = vector.extract_strided_slice %20 {offsets = [0, 0], sizes = [16, 511], strides = [1, 1]} : vector<16x512xf32> to vector<16x511xf32>
    %58 = tpu.concatenate %56, %57 in 1 : vector<16x1xf32>, vector<16x511xf32> -> vector<16x512xf32>
    %cst_40 = arith.constant 0.000000e+00 : f32
    %59 = vector.broadcast %cst_40 : f32 to vector<16x512xf32>
    %60 = arith.select %33, %58, %59 : vector<16x512xi1>, vector<16x512xf32>
    %c48 = arith.constant 48 : index
    %c0_41 = arith.constant 0 : index
    %61 = vector.load %arg7[%c48, %c0_41] : memref<144x512xf32, #tpu.memory_space<vmem>>, vector<16x512xf32>
    tpu.vector_store %arg7[%c48, %c0_41], %60 {strides = array<i32>} : memref<144x512xf32, #tpu.memory_space<vmem>>, vector<16x512xf32>,
    %c64 = arith.constant 64 : index
    %c0_42 = arith.constant 0 : index
    %62 = vector.load %arg7[%c64, %c0_42] : memref<144x512xf32, #tpu.memory_space<vmem>>, vector<16x512xf32>
    tpu.vector_store %arg7[%c64, %c0_42], %20 {strides = array<i32>} : memref<144x512xf32, #tpu.memory_space<vmem>>, vector<16x512xf32>,
    %63 = vector.extract_strided_slice %20 {offsets = [0, 1], sizes = [16, 511], strides = [1, 1]} : vector<16x512xf32> to vector<16x511xf32>
    %64 = vector.extract_strided_slice %20 {offsets = [0, 0], sizes = [16, 1], strides = [1, 1]} : vector<16x512xf32> to vector<16x1xf32>
    %65 = tpu.concatenate %63, %64 in 1 : vector<16x511xf32>, vector<16x1xf32> -> vector<16x512xf32>
    %cst_43 = arith.constant 0.000000e+00 : f32
    %66 = vector.broadcast %cst_43 : f32 to vector<16x512xf32>
    %67 = arith.select %35, %65, %66 : vector<16x512xi1>, vector<16x512xf32>
    %c80 = arith.constant 80 : index
    %c0_44 = arith.constant 0 : index
    %68 = vector.load %arg7[%c80, %c0_44] : memref<144x512xf32, #tpu.memory_space<vmem>>, vector<16x512xf32>
    tpu.vector_store %arg7[%c80, %c0_44], %67 {strides = array<i32>} : memref<144x512xf32, #tpu.memory_space<vmem>>, vector<16x512xf32>,
    %69 = vector.extract_strided_slice %20 {offsets = [0, 15], sizes = [16, 497], strides = [1, 1]} : vector<16x512xf32> to vector<16x497xf32>
    %70 = vector.extract_strided_slice %20 {offsets = [0, 0], sizes = [16, 15], strides = [1, 1]} : vector<16x512xf32> to vector<16x15xf32>
    %71 = tpu.concatenate %69, %70 in 1 : vector<16x497xf32>, vector<16x15xf32> -> vector<16x512xf32>
    %72 = arith.andi %31, %33 : vector<16x512xi1>
    %cst_45 = arith.constant 0.000000e+00 : f32
    %73 = vector.broadcast %cst_45 : f32 to vector<16x512xf32>
    %74 = arith.select %72, %71, %73 : vector<16x512xi1>, vector<16x512xf32>
    %c96 = arith.constant 96 : index
    %c0_46 = arith.constant 0 : index
    %75 = vector.load %arg7[%c96, %c0_46] : memref<144x512xf32, #tpu.memory_space<vmem>>, vector<16x512xf32>
    tpu.vector_store %arg7[%c96, %c0_46], %74 {strides = array<i32>} : memref<144x512xf32, #tpu.memory_space<vmem>>, vector<16x512xf32>,
    %76 = vector.extract_strided_slice %20 {offsets = [0, 16], sizes = [16, 496], strides = [1, 1]} : vector<16x512xf32> to vector<16x496xf32>
    %77 = vector.extract_strided_slice %20 {offsets = [0, 0], sizes = [16, 16], strides = [1, 1]} : vector<16x512xf32> to vector<16x16xf32>
    %78 = tpu.concatenate %76, %77 in 1 : vector<16x496xf32>, vector<16x16xf32> -> vector<16x512xf32>
    %cst_47 = arith.constant 0.000000e+00 : f32
    %79 = vector.broadcast %cst_47 : f32 to vector<16x512xf32>
    %80 = arith.select %31, %78, %79 : vector<16x512xi1>, vector<16x512xf32>
    %c112 = arith.constant 112 : index
    %c0_48 = arith.constant 0 : index
    %81 = vector.load %arg7[%c112, %c0_48] : memref<144x512xf32, #tpu.memory_space<vmem>>, vector<16x512xf32>
    tpu.vector_store %arg7[%c112, %c0_48], %80 {strides = array<i32>} : memref<144x512xf32, #tpu.memory_space<vmem>>, vector<16x512xf32>,
    %82 = vector.extract_strided_slice %20 {offsets = [0, 17], sizes = [16, 495], strides = [1, 1]} : vector<16x512xf32> to vector<16x495xf32>
    %83 = vector.extract_strided_slice %20 {offsets = [0, 0], sizes = [16, 17], strides = [1, 1]} : vector<16x512xf32> to vector<16x17xf32>
    %84 = tpu.concatenate %82, %83 in 1 : vector<16x495xf32>, vector<16x17xf32> -> vector<16x512xf32>
    %85 = arith.andi %31, %35 : vector<16x512xi1>
    %cst_49 = arith.constant 0.000000e+00 : f32
    %86 = vector.broadcast %cst_49 : f32 to vector<16x512xf32>
    %87 = arith.select %85, %84, %86 : vector<16x512xi1>, vector<16x512xf32>
    %c128 = arith.constant 128 : index
    %c0_50 = arith.constant 0 : index
    %88 = vector.load %arg7[%c128, %c0_50] : memref<144x512xf32, #tpu.memory_space<vmem>>, vector<16x512xf32>
    tpu.vector_store %arg7[%c128, %c0_50], %87 {strides = array<i32>} : memref<144x512xf32, #tpu.memory_space<vmem>>, vector<16x512xf32>,
    %c0_51 = arith.constant 0 : index
    %c0_52 = arith.constant 0 : index
    %89 = vector.load %arg4[%c0_51, %c0_52] : memref<112x160xf32, #tpu.memory_space<vmem>>, vector<96x144xf32>
    %c0_53 = arith.constant 0 : index
    %c144 = arith.constant 144 : index
    %90 = vector.load %arg4[%c0_53, %c144] : memref<112x160xf32, #tpu.memory_space<vmem>>, vector<96x1xf32>
    %c0_54 = arith.constant 0 : index
    %c0_55 = arith.constant 0 : index
    %91 = vector.load %arg7[%c0_54, %c0_55] : memref<144x512xf32, #tpu.memory_space<vmem>>, vector<144x512xf32>
    %cst_56 = arith.constant dense<0.000000e+00> : vector<96x512xf32>
    %92 = tpu.matmul %89, %91, %cst_56 {dimension_numbers = #tpu.dot_dimension_numbers<[1], [0], [0], [1], [0, 0, 1, 1], [], []>} : vector<96x144xf32>, vector<144x512xf32>, vector<96x512xf32> -> vector<96x512xf32>
    %93 = vector.broadcast %90 : vector<96x1xf32> to vector<96x512xf32>
    %94 = arith.addf %92, %93 : vector<96x512xf32>
    %cst_57 = arith.constant 0.000000e+00 : f32
    %95 = vector.broadcast %cst_57 : f32 to vector<96x512xf32>
    %96 = arith.cmpf ogt, %94, %95 : vector<96x512xf32>
    %cst_58 = arith.constant 2.000000e-01 : f32
    %97 = vector.broadcast %cst_58 : f32 to vector<96x512xf32>
    %98 = arith.mulf %97, %94 : vector<96x512xf32>
    %99 = arith.select %96, %94, %98 : vector<96x512xi1>, vector<96x512xf32>
    %c0_59 = arith.constant 0 : index
    %c0_60 = arith.constant 0 : index
    %100 = vector.load %arg8[%c0_59, %c0_60] : memref<96x512xf32, #tpu.memory_space<vmem>>, vector<96x512xf32>
    tpu.vector_store %arg8[%c0_59, %c0_60], %99 {strides = array<i32>} : memref<96x512xf32, #tpu.memory_space<vmem>>, vector<96x512xf32>,
    %c0_61 = arith.constant 0 : index
    %c145 = arith.constant 145 : index
    %101 = vector.load %arg4[%c0_61, %c145] : memref<112x160xf32, #tpu.memory_space<vmem>>, vector<96x6xf32>
    %c0_62 = arith.constant 0 : index
    %c151 = arith.constant 151 : index
    %102 = vector.load %arg4[%c0_62, %c151] : memref<112x160xf32, #tpu.memory_space<vmem>>, vector<96x6xf32>
    %103 = vector.extract_strided_slice %99 {offsets = [0, 0], sizes = [96, 256], strides = [1, 1]} : vector<96x512xf32> to vector<96x256xf32>
    %cst_63 = arith.constant dense<0.000000e+00> : vector<96xf32>
    %104 = vector.multi_reduction <add>, %103, %cst_63 [1] : vector<96x256xf32> to vector<96xf32>
    %105 = vector.shape_cast %104 : vector<96xf32> to vector<96x1xf32>
    %cst_64 = arith.constant 3.906250e-03 : f32
    %106 = vector.broadcast %cst_64 : f32 to vector<96x1xf32>
    %107 = arith.mulf %105, %106 : vector<96x1xf32>
    %108 = vector.broadcast %107 : vector<96x1xf32> to vector<96x6xf32>
    %109 = arith.mulf %101, %108 : vector<96x6xf32>
    %cst_65 = arith.constant dense<0.000000e+00> : vector<6xf32>
    %110 = vector.multi_reduction <add>, %109, %cst_65 [0] : vector<96x6xf32> to vector<6xf32>
    %111 = vector.shape_cast %110 : vector<6xf32> to vector<1x6xf32>
    %cst_66 = arith.constant 0.000000e+00 : f32
    %112 = vector.broadcast %cst_66 : f32 to vector<1x6xf32>
    %113 = arith.maximumf %111, %112 : vector<1x6xf32>
    %114 = vector.broadcast %113 : vector<1x6xf32> to vector<96x6xf32>
    %115 = arith.mulf %102, %114 : vector<96x6xf32>
    %cst_67 = arith.constant dense<0.000000e+00> : vector<96xf32>
    %116 = vector.multi_reduction <add>, %115, %cst_67 [1] : vector<96x6xf32> to vector<96xf32>
    %117 = vector.shape_cast %116 : vector<96xf32> to vector<96x1xf32>
    %118 = arith.negf %117 : vector<96x1xf32>
    %119 = math.exp %118 : vector<96x1xf32>
    %cst_68 = arith.constant 1.000000e+00 : f32
    %120 = vector.broadcast %cst_68 : f32 to vector<96x1xf32>
    %121 = arith.addf %120, %119 : vector<96x1xf32>
    %122 = arith.divf %120, %121 : vector<96x1xf32>
    %123 = vector.extract_strided_slice %99 {offsets = [0, 256], sizes = [96, 256], strides = [1, 1]} : vector<96x512xf32> to vector<96x256xf32>
    %cst_69 = arith.constant dense<0.000000e+00> : vector<96xf32>
    %124 = vector.multi_reduction <add>, %123, %cst_69 [1] : vector<96x256xf32> to vector<96xf32>
    %125 = vector.shape_cast %124 : vector<96xf32> to vector<96x1xf32>
    %cst_70 = arith.constant 3.906250e-03 : f32
    %126 = vector.broadcast %cst_70 : f32 to vector<96x1xf32>
    %127 = arith.mulf %125, %126 : vector<96x1xf32>
    %128 = vector.broadcast %127 : vector<96x1xf32> to vector<96x6xf32>
    %129 = arith.mulf %101, %128 : vector<96x6xf32>
    %cst_71 = arith.constant dense<0.000000e+00> : vector<6xf32>
    %130 = vector.multi_reduction <add>, %129, %cst_71 [0] : vector<96x6xf32> to vector<6xf32>
    %131 = vector.shape_cast %130 : vector<6xf32> to vector<1x6xf32>
    %cst_72 = arith.constant 0.000000e+00 : f32
    %132 = vector.broadcast %cst_72 : f32 to vector<1x6xf32>
    %133 = arith.maximumf %131, %132 : vector<1x6xf32>
    %134 = vector.broadcast %133 : vector<1x6xf32> to vector<96x6xf32>
    %135 = arith.mulf %102, %134 : vector<96x6xf32>
    %cst_73 = arith.constant dense<0.000000e+00> : vector<96xf32>
    %136 = vector.multi_reduction <add>, %135, %cst_73 [1] : vector<96x6xf32> to vector<96xf32>
    %137 = vector.shape_cast %136 : vector<96xf32> to vector<96x1xf32>
    %138 = arith.negf %137 : vector<96x1xf32>
    %139 = math.exp %138 : vector<96x1xf32>
    %cst_74 = arith.constant 1.000000e+00 : f32
    %140 = vector.broadcast %cst_74 : f32 to vector<96x1xf32>
    %141 = arith.addf %140, %139 : vector<96x1xf32>
    %142 = arith.divf %140, %141 : vector<96x1xf32>
    %c0_75 = arith.constant 0 : index
    %c0_76 = arith.constant 0 : index
    %143 = vector.load %arg8[%c0_75, %c0_76] : memref<96x512xf32, #tpu.memory_space<vmem>>, vector<96x256xf32>
    %144 = vector.broadcast %122 : vector<96x1xf32> to vector<96x256xf32>
    %145 = arith.mulf %143, %144 : vector<96x256xf32>
    %c0_77 = arith.constant 0 : index
    %c0_78 = arith.constant 0 : index
    %146 = vector.load %arg8[%c0_77, %c0_78] : memref<96x512xf32, #tpu.memory_space<vmem>>, vector<96x256xf32>
    tpu.vector_store %arg8[%c0_77, %c0_78], %145 {strides = array<i32>} : memref<96x512xf32, #tpu.memory_space<vmem>>, vector<96x256xf32>,
    %c0_79 = arith.constant 0 : index
    %c256_80 = arith.constant 256 : index
    %147 = vector.load %arg8[%c0_79, %c256_80] : memref<96x512xf32, #tpu.memory_space<vmem>>, vector<96x256xf32>
    %148 = vector.broadcast %142 : vector<96x1xf32> to vector<96x256xf32>
    %149 = arith.mulf %147, %148 : vector<96x256xf32>
    %c0_81 = arith.constant 0 : index
    %c256_82 = arith.constant 256 : index
    %150 = vector.load %arg8[%c0_81, %c256_82] : memref<96x512xf32, #tpu.memory_space<vmem>>, vector<96x256xf32>
    tpu.vector_store %arg8[%c0_81, %c256_82], %149 {strides = array<i32>} : memref<96x512xf32, #tpu.memory_space<vmem>>, vector<96x256xf32>,
    %c96_83 = arith.constant 96 : index
    %c0_84 = arith.constant 0 : index
    %151 = vector.load %arg4[%c96_83, %c0_84] : memref<112x160xf32, #tpu.memory_space<vmem>>, vector<9x96xf32>
    %c96_85 = arith.constant 96 : index
    %c96_86 = arith.constant 96 : index
    %152 = vector.load %arg4[%c96_85, %c96_86] : memref<112x160xf32, #tpu.memory_space<vmem>>, vector<9x1xf32>
    %c0_87 = arith.constant 0 : index
    %c0_88 = arith.constant 0 : index
    %153 = vector.load %arg8[%c0_87, %c0_88] : memref<96x512xf32, #tpu.memory_space<vmem>>, vector<96x512xf32>
    %cst_89 = arith.constant dense<0.000000e+00> : vector<9x512xf32>
    %154 = tpu.matmul %151, %153, %cst_89 {dimension_numbers = #tpu.dot_dimension_numbers<[1], [0], [0], [1], [0, 0, 1, 1], [], []>} : vector<9x96xf32>, vector<96x512xf32>, vector<9x512xf32> -> vector<9x512xf32>
    %155 = vector.broadcast %152 : vector<9x1xf32> to vector<9x512xf32>
    %156 = arith.addf %154, %155 : vector<9x512xf32>
    %157 = vector.extract_strided_slice %156 {offsets = [0, 0], sizes = [3, 512], strides = [1, 1]} : vector<9x512xf32> to vector<3x512xf32>
    %158 = vector.extract_strided_slice %156 {offsets = [3, 0], sizes = [3, 512], strides = [1, 1]} : vector<9x512xf32> to vector<3x512xf32>
    %159 = vector.extract_strided_slice %156 {offsets = [6, 0], sizes = [3, 512], strides = [1, 1]} : vector<9x512xf32> to vector<3x512xf32>
    %160 = arith.maximumf %157, %158 : vector<3x512xf32>
    %161 = arith.maximumf %160, %159 : vector<3x512xf32>
    %162 = arith.subf %157, %161 : vector<3x512xf32>
    %163 = math.exp %162 : vector<3x512xf32>
    %164 = arith.subf %158, %161 : vector<3x512xf32>
    %165 = math.exp %164 : vector<3x512xf32>
    %166 = arith.subf %159, %161 : vector<3x512xf32>
    %167 = math.exp %166 : vector<3x512xf32>
    %168 = arith.addf %163, %165 : vector<3x512xf32>
    %169 = arith.addf %168, %167 : vector<3x512xf32>
    %c0_90 = arith.constant 0 : index
    %c0_91 = arith.constant 0 : index
    %170 = vector.load %arg6[%c0_90, %c0_91] : memref<16x512xf32, #tpu.memory_space<vmem>>, vector<3x512xf32>
    %c3_92 = arith.constant 3 : index
    %c0_93 = arith.constant 0 : index
    %171 = vector.load %arg6[%c3_92, %c0_93] : memref<16x512xf32, #tpu.memory_space<vmem>>, vector<3x512xf32>
    %c8_94 = arith.constant 8 : index
    %c0_95 = arith.constant 0 : index
    %172 = vector.load %arg6[%c8_94, %c0_95] : memref<16x512xf32, #tpu.memory_space<vmem>>, vector<3x512xf32>
    %173 = arith.mulf %170, %163 : vector<3x512xf32>
    %174 = arith.mulf %171, %165 : vector<3x512xf32>
    %175 = arith.addf %173, %174 : vector<3x512xf32>
    %176 = arith.mulf %172, %167 : vector<3x512xf32>
    %177 = arith.addf %175, %176 : vector<3x512xf32>
    %178 = arith.divf %177, %169 : vector<3x512xf32>
    %179 = vector.extract_strided_slice %178 {offsets = [0, 0], sizes = [3, 256], strides = [1, 1]} : vector<3x512xf32> to vector<3x256xf32>
    %c0_96 = arith.constant 0 : index
    %c0_97 = arith.constant 0 : index
    %c0_98 = arith.constant 0 : index
    %180 = vector.load %arg5[%c0_96, %c0_97, %c0_98] : memref<2x3x256xf32, #tpu.memory_space<vmem>>, vector<1x3x256xf32>
    %181 = vector.shape_cast %180 : vector<1x3x256xf32> to vector<3x256xf32>
    %182 = vector.shape_cast %179 : vector<3x256xf32> to vector<1x3x256xf32>
    tpu.vector_store %arg5[%c0_96, %c0_97, %c0_98], %182 {strides = array<i32>} : memref<2x3x256xf32, #tpu.memory_space<vmem>>, vector<1x3x256xf32>,
    %183 = vector.extract_strided_slice %178 {offsets = [0, 256], sizes = [3, 256], strides = [1, 1]} : vector<3x512xf32> to vector<3x256xf32>
    %c1_99 = arith.constant 1 : index
    %c0_100 = arith.constant 0 : index
    %c0_101 = arith.constant 0 : index
    %184 = vector.load %arg5[%c1_99, %c0_100, %c0_101] : memref<2x3x256xf32, #tpu.memory_space<vmem>>, vector<1x3x256xf32>
    %185 = vector.shape_cast %184 : vector<1x3x256xf32> to vector<3x256xf32>
    %186 = vector.shape_cast %183 : vector<3x256xf32> to vector<1x3x256xf32>
    tpu.vector_store %arg5[%c1_99, %c0_100, %c0_101], %186 {strides = array<i32>} : memref<2x3x256xf32, #tpu.memory_space<vmem>>, vector<1x3x256xf32>,
    return
  }
  func.func @transform_0(%arg0: i32) -> (i32, i32, i32) {
    %c0_i32 = arith.constant 0 : i32
    %c0_i32_0 = arith.constant 0 : i32
    %c0_i32_1 = arith.constant 0 : i32
    %c0_i32_2 = arith.constant 0 : i32
    return %c0_i32, %c0_i32_0, %c0_i32_1 : i32, i32, i32
  }
  func.func @transform_1(%arg0: i32) -> (i32, i32, i32) {
    %c0_i32 = arith.constant 0 : i32
    %c0_i32_0 = arith.constant 0 : i32
    %c0_i32_1 = arith.constant 0 : i32
    %c0_i32_2 = arith.constant 0 : i32
    return %c0_i32, %c0_i32_0, %c0_i32_1 : i32, i32, i32
  }
  func.func @transform_2(%arg0: i32) -> (i32, i32, i32) {
    %c0_i32 = arith.constant 0 : i32
    %c0_i32_0 = arith.constant 0 : i32
    %c0_i32_1 = arith.constant 0 : i32
    %c0_i32_2 = arith.constant 0 : i32
    return %c0_i32, %c0_i32_0, %c0_i32_1 : i32, i32, i32
  }
  func.func @transform_3(%arg0: i32) -> (i32, i32) {
    %c0_i32 = arith.constant 0 : i32
    %c0_i32_0 = arith.constant 0 : i32
    %c0_i32_1 = arith.constant 0 : i32
    return %c0_i32, %c0_i32_0 : i32, i32
  }
  func.func @transform_4(%arg0: i32) -> (i32, i32, i32) {
    %c0_i32 = arith.constant 0 : i32
    %c0_i32_0 = arith.constant 0 : i32
    %c0_i32_1 = arith.constant 0 : i32
    %c0_i32_2 = arith.constant 0 : i32
    return %c0_i32, %c0_i32_0, %c0_i32_1 : i32, i32, i32
  }
}

</mosaic_0001>

<llo_original>
// kernel: _compositor_call.1
$region0: #{_compositor_call.1}
  #allocation0 [shape = 'u32[]', space=smem, size = 0x4, offset = 0x4, fixed_abs, tag = 'smem constant byte address 0x4 - core index']
  #allocation1 [shape = 'u32[144,128]{1,0:T(1,128)}', space=vmem, size = 0x12000, scoped, tag = 'internal scratch']
  #allocation2 [shape = 'f32[16,512]{1,0:T(8,128)}', space=vmem, size = 0x8000, scoped, tag = 'scratch operand']
  #allocation3 [shape = 'f32[144,512]{1,0:T(8,128)}', space=vmem, size = 0x48000, scoped, tag = 'scratch operand']
  #allocation4 [shape = 'f32[96,512]{1,0:T(8,128)}', space=vmem, size = 0x30000, scoped, tag = 'scratch operand']
  %s0 = inlined_call_operand.vmem [shape: f32[2,3,256], index: 0, kind: input, shape index: {}]
  %s1 = inlined_call_operand.vmem [shape: f32[2,3,256], index: 1, kind: input, shape index: {}]
  %s2 = inlined_call_operand.vmem [shape: f32[2,3,256], index: 2, kind: input, shape index: {}]
  %s3 = inlined_call_operand.vmem [shape: f32[112,160], index: 3, kind: input, shape index: {}]
  %s4 = inlined_call_operand.vmem [shape: f32[2,3,256], index: 4, kind: output, shape index: {}]
  %s5 = sld [smem:[#allocation0]]
  $region26: #{_compositor_call.1} parent=0
    _
  %s7 = ssub.s32 1, %s5
  %s8 = scalar_select 0, %s7, %s5
  // Predicated region
  $region2: #{_compositor_call.1} parent=0 // pred_check
    _
  $region3: #{_compositor_call.1} parent=0 // pred_check_branch
    %10 = sbr.rel (0) target = $region5
  $region4: #{_compositor_call.1} parent=0 // pred_region
    _
  $region5: #{_compositor_call.1} parent=0 // pred_fallthru
    _
  // Predicated region
  $region6: #{_compositor_call.1} parent=0 // pred_check
    _
  $region7: #{_compositor_call.1} parent=0 // pred_check_branch
    %12 = sbr.rel (0) target = $region9
  $region8: #{_compositor_call.1} parent=0 // pred_region
    _
  $region9: #{_compositor_call.1} parent=0 // pred_fallthru
    _
  // Predicated region
  $region10: #{_compositor_call.1} parent=0 // pred_check
    _
  $region11: #{_compositor_call.1} parent=0 // pred_check_branch
    %14 = sbr.rel (0) target = $region13
  $region12: #{_compositor_call.1} parent=0 // pred_region
    _
  $region13: #{_compositor_call.1} parent=0 // pred_fallthru
    _
  // Predicated region
  $region14: #{_compositor_call.1} parent=0 // pred_check
    _
  $region15: #{_compositor_call.1} parent=0 // pred_check_branch
    %16 = sbr.rel (0) target = $region17
  $region16: #{_compositor_call.1} parent=0 // pred_region
    _
  $region17: #{_compositor_call.1} parent=0 // pred_fallthru
    _
  %17 = vst [vmem:[#allocation2] sm:$0xff] 0.0
  %18 = vst [vmem:[#allocation2 + $0x8] sm:$0xff] 0.0
  %19 = vst [vmem:[#allocation2 + $0x10] sm:$0xff] 0.0
  %20 = vst [vmem:[#allocation2 + $0x18] sm:$0xff] 0.0
  %21 = vst [vmem:[#allocation2 + $0x20] sm:$0xff] 0.0
  %22 = vst [vmem:[#allocation2 + $0x28] sm:$0xff] 0.0
  %23 = vst [vmem:[#allocation2 + $0x30] sm:$0xff] 0.0
  %24 = vst [vmem:[#allocation2 + $0x38] sm:$0xff] 0.0
  %v25 = vld [vmem:[%s0] sm:$0x77]
  %v27 = vcombine.high %v25, %v25
  %29 = vst [vmem:[#allocation2] sm:$0x7] %v25
  %30 = vst [vmem:[#allocation2 + $0x8] sm:$0x7] %v27
  %s31 = scalar_lea.vmem %s0, 8
  %v32 = vld [vmem:[%s31] sm:$0x77]
  %v34 = vcombine.high %v32, %v32
  %36 = vst [vmem:[#allocation2 + $0x10] sm:$0x7] %v32
  %37 = vst [vmem:[#allocation2 + $0x18] sm:$0x7] %v34
  %v38 = vld [vmem:[%s1] sm:$0x77]
  %v40 = vcombine.high %v38, %v38
  %v41 = vrot.slane %v38, 5
  %v42 = vrot.slane %v40, 5
  %45 = vst [vmem:[#allocation2] sm:$0x38] %v41
  %46 = vst [vmem:[#allocation2 + $0x8] sm:$0x38] %v42
  %s47 = scalar_lea.vmem %s1, 8
  %v48 = vld [vmem:[%s47] sm:$0x77]
  %v50 = vcombine.high %v48, %v48
  %v51 = vrot.slane %v48, 5
  %v52 = vrot.slane %v50, 5
  %55 = vst [vmem:[#allocation2 + $0x10] sm:$0x38] %v51
  %56 = vst [vmem:[#allocation2 + $0x18] sm:$0x38] %v52
  %v57 = vld [vmem:[%s2] sm:$0x77]
  %v59 = vcombine.high %v57, %v57
  %61 = vst [vmem:[#allocation2 + $0x20] sm:$0x7] %v57
  %62 = vst [vmem:[#allocation2 + $0x28] sm:$0x7] %v59
  %s63 = scalar_lea.vmem %s2, 8
  %v64 = vld [vmem:[%s63] sm:$0x77]
  %v66 = vcombine.high %v64, %v64
  %68 = vst [vmem:[#allocation2 + $0x30] sm:$0x7] %v64
  %69 = vst [vmem:[#allocation2 + $0x38] sm:$0x7] %v66
  %v70 = vld [vmem:[#allocation2] sm:$0xff]
  %v71 = vld [vmem:[#allocation2 + $0x8] sm:$0xff]
  %v72 = vld [vmem:[#allocation2 + $0x10] sm:$0xff]
  %v73 = vld [vmem:[#allocation2 + $0x18] sm:$0xff]
  %v74 = vld [vmem:[#allocation2 + $0x20] sm:$0xff]
  %v75 = vld [vmem:[#allocation2 + $0x28] sm:$0xff]
  %v76 = vld [vmem:[#allocation2 + $0x30] sm:$0xff]
  %v77 = vld [vmem:[#allocation2 + $0x38] sm:$0xff]
  %v78 = vlaneseq
  %v79 = vand.u32 %v78, 127
  %v80 = vadd.s32 %v79, 128
  %v81 = vadd.s32 %v79, 256
  %v82 = vadd.s32 %v79, 384
  %v83 = vand.u32 %v79, 15
  %v84 = vand.u32 %v80, 15
  %v85 = vand.u32 %v81, 15
  %v86 = vand.u32 %v82, 15
  %v87 = vshra.s32 %v79, 4
  %v88 = vshra.s32 %v80, 4
  %v89 = vshra.s32 %v81, 4
  %v90 = vshra.s32 %v82, 4
  %v91 = vand.u32 %v87, 15
  %v92 = vand.u32 %v88, 15
  %v93 = vand.u32 %v89, 15
  %v94 = vand.u32 %v90, 15
  %vm95 = vcmp.ge.s32.totalorder %v91, 1
  %vm96 = vcmp.ge.s32.totalorder %v92, 1
  %vm97 = vcmp.ge.s32.totalorder %v93, 1
  %vm98 = vcmp.ge.s32.totalorder %v94, 1
  %vm99 = vcmp.lt.s32.totalorder %v91, 15
  %vm100 = vcmp.lt.s32.totalorder %v92, 15
  %vm101 = vcmp.lt.s32.totalorder %v93, 15
  %vm102 = vcmp.lt.s32.totalorder %v94, 15
  %vm103 = vcmp.ge.s32.totalorder %v83, 1
  %vm104 = vcmp.ge.s32.totalorder %v84, 1
  %vm105 = vcmp.ge.s32.totalorder %v85, 1
  %vm106 = vcmp.ge.s32.totalorder %v86, 1
  %vm107 = vcmp.lt.s32.totalorder %v83, 15
  %vm108 = vcmp.lt.s32.totalorder %v84, 15
  %vm109 = vcmp.lt.s32.totalorder %v85, 15
  %vm110 = vcmp.lt.s32.totalorder %v86, 15
  %113 = vrot.lane.b32.xlu0 %v73, 17
  %v114 = vpop.permute.xlu0 %113
  %115 = vrot.lane.b32.xlu0 %v77, 17
  %v116 = vpop.permute.xlu0 %115
  %125 = vrot.lane.b32.xlu0 %v70, 17
  %v126 = vpop.permute.xlu0 %125
  %127 = vrot.lane.b32.xlu0 %v71, 17
  %v128 = vpop.permute.xlu0 %127
  %129 = vrot.lane.b32.xlu0 %v72, 17
  %v130 = vpop.permute.xlu0 %129
  %131 = vrot.lane.b32.xlu0 %v74, 17
  %v132 = vpop.permute.xlu0 %131
  %133 = vrot.lane.b32.xlu0 %v75, 17
  %v134 = vpop.permute.xlu0 %133
  %135 = vrot.lane.b32.xlu0 %v76, 17
  %v136 = vpop.permute.xlu0 %135
  %vm137 = vcmask 138240
  %v138 = vsel %vm137, %v126, %v128
  %v139 = vsel %vm137, %v128, %v130
  %v140 = vsel %vm137, %v130, %v114
  %v141 = vsel %vm137, %v132, %v134
  %v142 = vsel %vm137, %v134, %v136
  %v143 = vsel %vm137, %v136, %v116
  %v152 = vsel %vm137, %v114, %v126
  %v153 = vsel %vm137, %v116, %v132
  %vm154 = vmand %vm95, %vm103
  %vm155 = vmand %vm96, %vm104
  %vm156 = vmand %vm97, %vm105
  %vm157 = vmand %vm98, %vm106
  %v158 = vsel %vm154, %v152, 0.0
  %v159 = vsel %vm155, %v138, 0.0
  %v160 = vsel %vm156, %v139, 0.0
  %v161 = vsel %vm157, %v140, 0.0
  %v162 = vsel %vm154, %v153, 0.0
  %v163 = vsel %vm155, %v141, 0.0
  %v164 = vsel %vm156, %v142, 0.0
  %v165 = vsel %vm157, %v143, 0.0
  %166 = vst [vmem:[#allocation3] sm:$0xff] %v158
  %167 = vst [vmem:[#allocation3 + $0x8] sm:$0xff] %v159
  %168 = vst [vmem:[#allocation3 + $0x10] sm:$0xff] %v160
  %169 = vst [vmem:[#allocation3 + $0x18] sm:$0xff] %v161
  %170 = vst [vmem:[#allocation3 + $0x20] sm:$0xff] %v162
  %171 = vst [vmem:[#allocation3 + $0x28] sm:$0xff] %v163
  %172 = vst [vmem:[#allocation3 + $0x30] sm:$0xff] %v164
  %173 = vst [vmem:[#allocation3 + $0x38] sm:$0xff] %v165
  %174 = vrot.lane.b32.xlu0 %v73, 16
  %v175 = vpop.permute.xlu0 %174
  %176 = vrot.lane.b32.xlu0 %v77, 16
  %v177 = vpop.permute.xlu0 %176
  %180 = vrot.lane.b32.xlu0 %v70, 16
  %v181 = vpop.permute.xlu0 %180
  %182 = vrot.lane.b32.xlu0 %v71, 16
  %v183 = vpop.permute.xlu0 %182
  %184 = vrot.lane.b32.xlu0 %v72, 16
  %v185 = vpop.permute.xlu0 %184
  %186 = vrot.lane.b32.xlu0 %v74, 16
  %v187 = vpop.permute.xlu0 %186
  %188 = vrot.lane.b32.xlu0 %v75, 16
  %v189 = vpop.permute.xlu0 %188
  %190 = vrot.lane.b32.xlu0 %v76, 16
  %v191 = vpop.permute.xlu0 %190
  %vm192 = vcmask 130048
  %v193 = vsel %vm192, %v181, %v183
  %v194 = vsel %vm192, %v183, %v185
  %v195 = vsel %vm192, %v185, %v175
  %v196 = vsel %vm192, %v187, %v189
  %v197 = vsel %vm192, %v189, %v191
  %v198 = vsel %vm192, %v191, %v177
  %v207 = vsel %vm192, %v175, %v181
  %v208 = vsel %vm192, %v177, %v187
  %v209 = vsel %vm95, %v207, 0.0
  %v210 = vsel %vm96, %v193, 0.0
  %v211 = vsel %vm97, %v194, 0.0
  %v212 = vsel %vm98, %v195, 0.0
  %v213 = vsel %vm95, %v208, 0.0
  %v214 = vsel %vm96, %v196, 0.0
  %v215 = vsel %vm97, %v197, 0.0
  %v216 = vsel %vm98, %v198, 0.0
  %217 = vst [vmem:[#allocation3 + $0x40] sm:$0xff] %v209
  %218 = vst [vmem:[#allocation3 + $0x48] sm:$0xff] %v210
  %219 = vst [vmem:[#allocation3 + $0x50] sm:$0xff] %v211
  %220 = vst [vmem:[#allocation3 + $0x58] sm:$0xff] %v212
  %221 = vst [vmem:[#allocation3 + $0x60] sm:$0xff] %v213
  %222 = vst [vmem:[#allocation3 + $0x68] sm:$0xff] %v214
  %223 = vst [vmem:[#allocation3 + $0x70] sm:$0xff] %v215
  %224 = vst [vmem:[#allocation3 + $0x78] sm:$0xff] %v216
  %225 = vrot.lane.b32.xlu0 %v73, 15
  %v226 = vpop.permute.xlu0 %225
  %227 = vrot.lane.b32.xlu0 %v77, 15
  %v228 = vpop.permute.xlu0 %227
  %231 = vrot.lane.b32.xlu0 %v70, 15
  %v232 = vpop.permute.xlu0 %231
  %233 = vrot.lane.b32.xlu0 %v71, 15
  %v234 = vpop.permute.xlu0 %233
  %235 = vrot.lane.b32.xlu0 %v72, 15
  %v236 = vpop.permute.xlu0 %235
  %237 = vrot.lane.b32.xlu0 %v74, 15
  %v238 = vpop.permute.xlu0 %237
  %239 = vrot.lane.b32.xlu0 %v75, 15
  %v240 = vpop.permute.xlu0 %239
  %241 = vrot.lane.b32.xlu0 %v76, 15
  %v242 = vpop.permute.xlu0 %241
  %vm243 = vcmask 121856
  %v244 = vsel %vm243, %v232, %v234
  %v245 = vsel %vm243, %v234, %v236
  %v246 = vsel %vm243, %v236, %v226
  %v247 = vsel %vm243, %v238, %v240
  %v248 = vsel %vm243, %v240, %v242
  %v249 = vsel %vm243, %v242, %v228
  %v258 = vsel %vm243, %v226, %v232
  %v259 = vsel %vm243, %v228, %v238
  %vm260 = vmand %vm95, %vm107
  %vm261 = vmand %vm96, %vm108
  %vm262 = vmand %vm97, %vm109
  %vm263 = vmand %vm98, %vm110
  %v264 = vsel %vm260, %v258, 0.0
  %v265 = vsel %vm261, %v244, 0.0
  %v266 = vsel %vm262, %v245, 0.0
  %v267 = vsel %vm263, %v246, 0.0
  %v268 = vsel %vm260, %v259, 0.0
  %v269 = vsel %vm261, %v247, 0.0
  %v270 = vsel %vm262, %v248, 0.0
  %v271 = vsel %vm263, %v249, 0.0
  %272 = vst [vmem:[#allocation3 + $0x80] sm:$0xff] %v264
  %273 = vst [vmem:[#allocation3 + $0x88] sm:$0xff] %v265
  %274 = vst [vmem:[#allocation3 + $0x90] sm:$0xff] %v266
  %275 = vst [vmem:[#allocation3 + $0x98] sm:$0xff] %v267
  %276 = vst [vmem:[#allocation3 + $0xa0] sm:$0xff] %v268
  %277 = vst [vmem:[#allocation3 + $0xa8] sm:$0xff] %v269
  %278 = vst [vmem:[#allocation3 + $0xb0] sm:$0xff] %v270
  %279 = vst [vmem:[#allocation3 + $0xb8] sm:$0xff] %v271
  %280 = vrot.lane.b32.xlu0 %v73, 1
  %v281 = vpop.permute.xlu0 %280
  %282 = vrot.lane.b32.xlu0 %v77, 1
  %v283 = vpop.permute.xlu0 %282
  %286 = vrot.lane.b32.xlu0 %v70, 1
  %v287 = vpop.permute.xlu0 %286
  %288 = vrot.lane.b32.xlu0 %v71, 1
  %v289 = vpop.permute.xlu0 %288
  %290 = vrot.lane.b32.xlu0 %v72, 1
  %v291 = vpop.permute.xlu0 %290
  %292 = vrot.lane.b32.xlu0 %v74, 1
  %v293 = vpop.permute.xlu0 %292
  %294 = vrot.lane.b32.xlu0 %v75, 1
  %v295 = vpop.permute.xlu0 %294
  %296 = vrot.lane.b32.xlu0 %v76, 1
  %v297 = vpop.permute.xlu0 %296
  %vm298 = vcmask 7168
  %v299 = vsel %vm298, %v287, %v289
  %v300 = vsel %vm298, %v289, %v291
  %v301 = vsel %vm298, %v291, %v281
  %v302 = vsel %vm298, %v293, %v295
  %v303 = vsel %vm298, %v295, %v297
  %v304 = vsel %vm298, %v297, %v283
  %v313 = vsel %vm298, %v281, %v287
  %v314 = vsel %vm298, %v283, %v293
  %v315 = vsel %vm103, %v313, 0.0
  %v316 = vsel %vm104, %v299, 0.0
  %v317 = vsel %vm105, %v300, 0.0
  %v318 = vsel %vm106, %v301, 0.0
  %v319 = vsel %vm103, %v314, 0.0
  %v320 = vsel %vm104, %v302, 0.0
  %v321 = vsel %vm105, %v303, 0.0
  %v322 = vsel %vm106, %v304, 0.0
  %323 = vst [vmem:[#allocation3 + $0xc0] sm:$0xff] %v315
  %324 = vst [vmem:[#allocation3 + $0xc8] sm:$0xff] %v316
  %325 = vst [vmem:[#allocation3 + $0xd0] sm:$0xff] %v317
  %326 = vst [vmem:[#allocation3 + $0xd8] sm:$0xff] %v318
  %327 = vst [vmem:[#allocation3 + $0xe0] sm:$0xff] %v319
  %328 = vst [vmem:[#allocation3 + $0xe8] sm:$0xff] %v320
  %329 = vst [vmem:[#allocation3 + $0xf0] sm:$0xff] %v321
  %330 = vst [vmem:[#allocation3 + $0xf8] sm:$0xff] %v322
  %331 = vst [vmem:[#allocation3 + $0x100] sm:$0xff] %v70
  %332 = vst [vmem:[#allocation3 + $0x108] sm:$0xff] %v71
  %333 = vst [vmem:[#allocation3 + $0x110] sm:$0xff] %v72
  %334 = vst [vmem:[#allocation3 + $0x118] sm:$0xff] %v73
  %335 = vst [vmem:[#allocation3 + $0x120] sm:$0xff] %v74
  %336 = vst [vmem:[#allocation3 + $0x128] sm:$0xff] %v75
  %337 = vst [vmem:[#allocation3 + $0x130] sm:$0xff] %v76
  %338 = vst [vmem:[#allocation3 + $0x138] sm:$0xff] %v77
  %339 = vrot.lane.b32.xlu0 %v70, 127
  %v340 = vpop.permute.xlu0 %339
  %341 = vrot.lane.b32.xlu0 %v71, 127
  %v342 = vpop.permute.xlu0 %341
  %343 = vrot.lane.b32.xlu0 %v72, 127
  %v344 = vpop.permute.xlu0 %343
  %345 = vrot.lane.b32.xlu0 %v73, 127
  %v346 = vpop.permute.xlu0 %345
  %347 = vrot.lane.b32.xlu0 %v74, 127
  %v348 = vpop.permute.xlu0 %347
  %349 = vrot.lane.b32.xlu0 %v75, 127
  %v350 = vpop.permute.xlu0 %349
  %351 = vrot.lane.b32.xlu0 %v76, 127
  %v352 = vpop.permute.xlu0 %351
  %353 = vrot.lane.b32.xlu0 %v77, 127
  %v354 = vpop.permute.xlu0 %353
  %vm355 = vcmask 1039360
  %v356 = vsel %vm355, %v340, %v342
  %v357 = vsel %vm355, %v342, %v344
  %v358 = vsel %vm355, %v344, %v346
  %v359 = vsel %vm355, %v348, %v350
  %v360 = vsel %vm355, %v350, %v352
  %v361 = vsel %vm355, %v352, %v354
  %v372 = vsel %vm355, %v346, %v340
  %v373 = vsel %vm355, %v354, %v348
  %v374 = vsel %vm107, %v356, 0.0
  %v375 = vsel %vm108, %v357, 0.0
  %v376 = vsel %vm109, %v358, 0.0
  %v377 = vsel %vm110, %v372, 0.0
  %v378 = vsel %vm107, %v359, 0.0
  %v379 = vsel %vm108, %v360, 0.0
  %v380 = vsel %vm109, %v361, 0.0
  %v381 = vsel %vm110, %v373, 0.0
  %382 = vst [vmem:[#allocation3 + $0x140] sm:$0xff] %v374
  %383 = vst [vmem:[#allocation3 + $0x148] sm:$0xff] %v375
  %384 = vst [vmem:[#allocation3 + $0x150] sm:$0xff] %v376
  %385 = vst [vmem:[#allocation3 + $0x158] sm:$0xff] %v377
  %386 = vst [vmem:[#allocation3 + $0x160] sm:$0xff] %v378
  %387 = vst [vmem:[#allocation3 + $0x168] sm:$0xff] %v379
  %388 = vst [vmem:[#allocation3 + $0x170] sm:$0xff] %v380
  %389 = vst [vmem:[#allocation3 + $0x178] sm:$0xff] %v381
  %390 = vrot.lane.b32.xlu0 %v70, 113
  %v391 = vpop.permute.xlu0 %390
  %392 = vrot.lane.b32.xlu0 %v71, 113
  %v393 = vpop.permute.xlu0 %392
  %394 = vrot.lane.b32.xlu0 %v72, 113
  %v395 = vpop.permute.xlu0 %394
  %396 = vrot.lane.b32.xlu0 %v73, 113
  %v397 = vpop.permute.xlu0 %396
  %398 = vrot.lane.b32.xlu0 %v74, 113
  %v399 = vpop.permute.xlu0 %398
  %400 = vrot.lane.b32.xlu0 %v75, 113
  %v401 = vpop.permute.xlu0 %400
  %402 = vrot.lane.b32.xlu0 %v76, 113
  %v403 = vpop.permute.xlu0 %402
  %404 = vrot.lane.b32.xlu0 %v77, 113
  %v405 = vpop.permute.xlu0 %404
  %vm406 = vcmask 924672
  %v407 = vsel %vm406, %v391, %v393
  %v408 = vsel %vm406, %v393, %v395
  %v409 = vsel %vm406, %v395, %v397
  %v410 = vsel %vm406, %v399, %v401
  %v411 = vsel %vm406, %v401, %v403
  %v412 = vsel %vm406, %v403, %v405
  %v423 = vsel %vm406, %v397, %v391
  %v424 = vsel %vm406, %v405, %v399
  %vm425 = vmand %vm99, %vm103
  %vm426 = vmand %vm100, %vm104
  %vm427 = vmand %vm101, %vm105
  %vm428 = vmand %vm102, %vm106
  %v429 = vsel %vm425, %v407, 0.0
  %v430 = vsel %vm426, %v408, 0.0
  %v431 = vsel %vm427, %v409, 0.0
  %v432 = vsel %vm428, %v423, 0.0
  %v433 = vsel %vm425, %v410, 0.0
  %v434 = vsel %vm426, %v411, 0.0
  %v435 = vsel %vm427, %v412, 0.0
  %v436 = vsel %vm428, %v424, 0.0
  %437 = vst [vmem:[#allocation3 + $0x180] sm:$0xff] %v429
  %438 = vst [vmem:[#allocation3 + $0x188] sm:$0xff] %v430
  %439 = vst [vmem:[#allocation3 + $0x190] sm:$0xff] %v431
  %440 = vst [vmem:[#allocation3 + $0x198] sm:$0xff] %v432
  %441 = vst [vmem:[#allocation3 + $0x1a0] sm:$0xff] %v433
  %442 = vst [vmem:[#allocation3 + $0x1a8] sm:$0xff] %v434
  %443 = vst [vmem:[#allocation3 + $0x1b0] sm:$0xff] %v435
  %444 = vst [vmem:[#allocation3 + $0x1b8] sm:$0xff] %v436
  %445 = vrot.lane.b32.xlu0 %v70, 112
  %v446 = vpop.permute.xlu0 %445
  %447 = vrot.lane.b32.xlu0 %v71, 112
  %v448 = vpop.permute.xlu0 %447
  %449 = vrot.lane.b32.xlu0 %v72, 112
  %v450 = vpop.permute.xlu0 %449
  %451 = vrot.lane.b32.xlu0 %v73, 112
  %v452 = vpop.permute.xlu0 %451
  %453 = vrot.lane.b32.xlu0 %v74, 112
  %v454 = vpop.permute.xlu0 %453
  %455 = vrot.lane.b32.xlu0 %v75, 112
  %v456 = vpop.permute.xlu0 %455
  %457 = vrot.lane.b32.xlu0 %v76, 112
  %v458 = vpop.permute.xlu0 %457
  %459 = vrot.lane.b32.xlu0 %v77, 112
  %v460 = vpop.permute.xlu0 %459
  %vm461 = vcmask 916480
  %v462 = vsel %vm461, %v446, %v448
  %v463 = vsel %vm461, %v448, %v450
  %v464 = vsel %vm461, %v450, %v452
  %v465 = vsel %vm461, %v454, %v456
  %v466 = vsel %vm461, %v456, %v458
  %v467 = vsel %vm461, %v458, %v460
  %v478 = vsel %vm461, %v452, %v446
  %v479 = vsel %vm461, %v460, %v454
  %v480 = vsel %vm99, %v462, 0.0
  %v481 = vsel %vm100, %v463, 0.0
  %v482 = vsel %vm101, %v464, 0.0
  %v483 = vsel %vm102, %v478, 0.0
  %v484 = vsel %vm99, %v465, 0.0
  %v485 = vsel %vm100, %v466, 0.0
  %v486 = vsel %vm101, %v467, 0.0
  %v487 = vsel %vm102, %v479, 0.0
  %488 = vst [vmem:[#allocation3 + $0x1c0] sm:$0xff] %v480
  %489 = vst [vmem:[#allocation3 + $0x1c8] sm:$0xff] %v481
  %490 = vst [vmem:[#allocation3 + $0x1d0] sm:$0xff] %v482
  %491 = vst [vmem:[#allocation3 + $0x1d8] sm:$0xff] %v483
  %492 = vst [vmem:[#allocation3 + $0x1e0] sm:$0xff] %v484
  %493 = vst [vmem:[#allocation3 + $0x1e8] sm:$0xff] %v485
  %494 = vst [vmem:[#allocation3 + $0x1f0] sm:$0xff] %v486
  %495 = vst [vmem:[#allocation3 + $0x1f8] sm:$0xff] %v487
  %496 = vrot.lane.b32.xlu0 %v70, 111
  %v497 = vpop.permute.xlu0 %496
  %498 = vrot.lane.b32.xlu0 %v71, 111
  %v499 = vpop.permute.xlu0 %498
  %500 = vrot.lane.b32.xlu0 %v72, 111
  %v501 = vpop.permute.xlu0 %500
  %502 = vrot.lane.b32.xlu0 %v73, 111
  %v503 = vpop.permute.xlu0 %502
  %504 = vrot.lane.b32.xlu0 %v74, 111
  %v505 = vpop.permute.xlu0 %504
  %506 = vrot.lane.b32.xlu0 %v75, 111
  %v507 = vpop.permute.xlu0 %506
  %508 = vrot.lane.b32.xlu0 %v76, 111
  %v509 = vpop.permute.xlu0 %508
  %510 = vrot.lane.b32.xlu0 %v77, 111
  %v511 = vpop.permute.xlu0 %510
  %vm512 = vcmask 908288
  %v513 = vsel %vm512, %v497, %v499
  %v514 = vsel %vm512, %v499, %v501
  %v515 = vsel %vm512, %v501, %v503
  %v516 = vsel %vm512, %v505, %v507
  %v517 = vsel %vm512, %v507, %v509
  %v518 = vsel %vm512, %v509, %v511
  %v529 = vsel %vm512, %v503, %v497
  %v530 = vsel %vm512, %v511, %v505
  %vm531 = vmand %vm99, %vm107
  %vm532 = vmand %vm100, %vm108
  %vm533 = vmand %vm101, %vm109
  %vm534 = vmand %vm102, %vm110
  %v535 = vsel %vm531, %v513, 0.0
  %v536 = vsel %vm532, %v514, 0.0
  %v537 = vsel %vm533, %v515, 0.0
  %v538 = vsel %vm534, %v529, 0.0
  %v539 = vsel %vm531, %v516, 0.0
  %v540 = vsel %vm532, %v517, 0.0
  %v541 = vsel %vm533, %v518, 0.0
  %v542 = vsel %vm534, %v530, 0.0
  %543 = vst [vmem:[#allocation3 + $0x200] sm:$0xff] %v535
  %544 = vst [vmem:[#allocation3 + $0x208] sm:$0xff] %v536
  %545 = vst [vmem:[#allocation3 + $0x210] sm:$0xff] %v537
  %546 = vst [vmem:[#allocation3 + $0x218] sm:$0xff] %v538
  %547 = vst [vmem:[#allocation3 + $0x220] sm:$0xff] %v539
  %548 = vst [vmem:[#allocation3 + $0x228] sm:$0xff] %v540
  %549 = vst [vmem:[#allocation3 + $0x230] sm:$0xff] %v541
  %550 = vst [vmem:[#allocation3 + $0x238] sm:$0xff] %v542
  %v551 = vld [vmem:[%s3] sm:$0xff]
  %v552 = vld [vmem:[%s3 + $0x8] sm:$0xff]
  %v553 = vld [vmem:[%s3 + $0x10] sm:$0xff]
  %v554 = vld [vmem:[%s3 + $0x18] sm:$0xff]
  %v555 = vld [vmem:[%s3 + $0x20] sm:$0xff]
  %v556 = vld [vmem:[%s3 + $0x28] sm:$0xff]
  %v557 = vld [vmem:[%s3 + $0x30] sm:$0xff]
  %v558 = vld [vmem:[%s3 + $0x38] sm:$0xff]
  %v559 = vld [vmem:[%s3 + $0x40] sm:$0xff]
  %v560 = vld [vmem:[%s3 + $0x48] sm:$0xff]
  %v561 = vld [vmem:[%s3 + $0x50] sm:$0xff]
  %v562 = vld [vmem:[%s3 + $0x58] sm:$0xff]
  %v563 = vld [vmem:[%s3 + $0x60] sm:$0xff]
  %v564 = vld [vmem:[%s3 + $0x68] sm:$0xff]
  %v565 = vld [vmem:[%s3 + $0x70] sm:$0xff]
  %v566 = vld [vmem:[%s3 + $0x78] sm:$0xff]
  %v567 = vld [vmem:[%s3 + $0x80] sm:$0xff]
  %v568 = vld [vmem:[%s3 + $0x88] sm:$0xff]
  %v569 = vld [vmem:[%s3 + $0x90] sm:$0xff]
  %v570 = vld [vmem:[%s3 + $0x98] sm:$0xff]
  %v571 = vld [vmem:[%s3 + $0xa0] sm:$0xff]
  %v572 = vld [vmem:[%s3 + $0xa8] sm:$0xff]
  %v573 = vld [vmem:[%s3 + $0xb0] sm:$0xff]
  %v574 = vld [vmem:[%s3 + $0xb8] sm:$0xff]
  %v575 = vld [vmem:[#allocation3] sm:$0xff]
  %v576 = vld [vmem:[#allocation3 + $0x8] sm:$0xff]
  %v577 = vld [vmem:[#allocation3 + $0x10] sm:$0xff]
  %v578 = vld [vmem:[#allocation3 + $0x18] sm:$0xff]
  %v579 = vld [vmem:[#allocation3 + $0x20] sm:$0xff]
  %v580 = vld [vmem:[#allocation3 + $0x28] sm:$0xff]
  %v581 = vld [vmem:[#allocation3 + $0x30] sm:$0xff]
  %v582 = vld [vmem:[#allocation3 + $0x38] sm:$0xff]
  %v583 = vld [vmem:[#allocation3 + $0x40] sm:$0xff]
  %v584 = vld [vmem:[#allocation3 + $0x48] sm:$0xff]
  %v585 = vld [vmem:[#allocation3 + $0x50] sm:$0xff]
  %v586 = vld [vmem:[#allocation3 + $0x58] sm:$0xff]
  %v587 = vld [vmem:[#allocation3 + $0x60] sm:$0xff]
  %v588 = vld [vmem:[#allocation3 + $0x68] sm:$0xff]
  %v589 = vld [vmem:[#allocation3 + $0x70] sm:$0xff]
  %v590 = vld [vmem:[#allocation3 + $0x78] sm:$0xff]
  %v591 = vld [vmem:[#allocation3 + $0x80] sm:$0xff]
  %v592 = vld [vmem:[#allocation3 + $0x88] sm:$0xff]
  %v593 = vld [vmem:[#allocation3 + $0x90] sm:$0xff]
  %v594 = vld [vmem:[#allocation3 + $0x98] sm:$0xff]
  %v595 = vld [vmem:[#allocation3 + $0xa0] sm:$0xff]
  %v596 = vld [vmem:[#allocation3 + $0xa8] sm:$0xff]
  %v597 = vld [vmem:[#allocation3 + $0xb0] sm:$0xff]
  %v598 = vld [vmem:[#allocation3 + $0xb8] sm:$0xff]
  %v599 = vld [vmem:[#allocation3 + $0xc0] sm:$0xff]
  %v600 = vld [vmem:[#allocation3 + $0xc8] sm:$0xff]
  %v601 = vld [vmem:[#allocation3 + $0xd0] sm:$0xff]
  %v602 = vld [vmem:[#allocation3 + $0xd8] sm:$0xff]
  %v603 = vld [vmem:[#allocation3 + $0xe0] sm:$0xff]
  %v604 = vld [vmem:[#allocation3 + $0xe8] sm:$0xff]
  %v605 = vld [vmem:[#allocation3 + $0xf0] sm:$0xff]
  %v606 = vld [vmem:[#allocation3 + $0xf8] sm:$0xff]
  %v607 = vld [vmem:[#allocation3 + $0x100] sm:$0xff]
  %v608 = vld [vmem:[#allocation3 + $0x108] sm:$0xff]
  %v609 = vld [vmem:[#allocation3 + $0x110] sm:$0xff]
  %v610 = vld [vmem:[#allocation3 + $0x118] sm:$0xff]
  %v611 = vld [vmem:[#allocation3 + $0x120] sm:$0xff]
  %v612 = vld [vmem:[#allocation3 + $0x128] sm:$0xff]
  %v613 = vld [vmem:[#allocation3 + $0x130] sm:$0xff]
  %v614 = vld [vmem:[#allocation3 + $0x138] sm:$0xff]
  %v615 = vld [vmem:[#allocation3 + $0x140] sm:$0xff]
  %v616 = vld [vmem:[#allocation3 + $0x148] sm:$0xff]
  %v617 = vld [vmem:[#allocation3 + $0x150] sm:$0xff]
  %v618 = vld [vmem:[#allocation3 + $0x158] sm:$0xff]
  %v619 = vld [vmem:[#allocation3 + $0x160] sm:$0xff]
  %v620 = vld [vmem:[#allocation3 + $0x168] sm:$0xff]
  %v621 = vld [vmem:[#allocation3 + $0x170] sm:$0xff]
  %v622 = vld [vmem:[#allocation3 + $0x178] sm:$0xff]
  %v623 = vld [vmem:[#allocation3 + $0x180] sm:$0xff]
  %v624 = vld [vmem:[#allocation3 + $0x188] sm:$0xff]
  %v625 = vld [vmem:[#allocation3 + $0x190] sm:$0xff]
  %v626 = vld [vmem:[#allocation3 + $0x198] sm:$0xff]
  %v627 = vld [vmem:[#allocation3 + $0x1a0] sm:$0xff]
  %v628 = vld [vmem:[#allocation3 + $0x1a8] sm:$0xff]
  %v629 = vld [vmem:[#allocation3 + $0x1b0] sm:$0xff]
  %v630 = vld [vmem:[#allocation3 + $0x1b8] sm:$0xff]
  %v631 = vld [vmem:[#allocation3 + $0x1c0] sm:$0xff]
  %v632 = vld [vmem:[#allocation3 + $0x1c8] sm:$0xff]
  %v633 = vld [vmem:[#allocation3 + $0x1d0] sm:$0xff]
  %v634 = vld [vmem:[#allocation3 + $0x1d8] sm:$0xff]
  %v635 = vld [vmem:[#allocation3 + $0x1e0] sm:$0xff]
  %v636 = vld [vmem:[#allocation3 + $0x1e8] sm:$0xff]
  %v637 = vld [vmem:[#allocation3 + $0x1f0] sm:$0xff]
  %v638 = vld [vmem:[#allocation3 + $0x1f8] sm:$0xff]
  %v639 = vld [vmem:[#allocation3 + $0x200] sm:$0xff]
  %v640 = vld [vmem:[#allocation3 + $0x208] sm:$0xff]
  %v641 = vld [vmem:[#allocation3 + $0x210] sm:$0xff]
  %v642 = vld [vmem:[#allocation3 + $0x218] sm:$0xff]
  %v643 = vld [vmem:[#allocation3 + $0x220] sm:$0xff]
  %v644 = vld [vmem:[#allocation3 + $0x228] sm:$0xff]
  %v645 = vld [vmem:[#allocation3 + $0x230] sm:$0xff]
  %v646 = vld [vmem:[#allocation3 + $0x238] sm:$0xff]
  %648 = vset.pattern.permute.xlu0 16
  %649 = vperm.xlu0 %648, %v552
  %v650 = vpop.permute.xlu0 %649
  %653 = vset.pattern.permute.xlu0 16
  %654 = vperm.xlu0 %653, %v554
  %v655 = vpop.permute.xlu0 %654
  %658 = vset.pattern.permute.xlu0 16
  %659 = vperm.xlu0 %658, %v556
  %v660 = vpop.permute.xlu0 %659
  %663 = vset.pattern.permute.xlu0 16
  %664 = vperm.xlu0 %663, %v558
  %v665 = vpop.permute.xlu0 %664
  %668 = vset.pattern.permute.xlu0 16
  %669 = vperm.xlu0 %668, %v560
  %v670 = vpop.permute.xlu0 %669
  %673 = vset.pattern.permute.xlu0 16
  %674 = vperm.xlu0 %673, %v562
  %v675 = vpop.permute.xlu0 %674
  %678 = vset.pattern.permute.xlu0 16
  %679 = vperm.xlu0 %678, %v564
  %v680 = vpop.permute.xlu0 %679
  %683 = vset.pattern.permute.xlu0 16
  %684 = vperm.xlu0 %683, %v566
  %v685 = vpop.permute.xlu0 %684
  %688 = vset.pattern.permute.xlu0 16
  %689 = vperm.xlu0 %688, %v568
  %v690 = vpop.permute.xlu0 %689
  %693 = vset.pattern.permute.xlu0 16
  %694 = vperm.xlu0 %693, %v570
  %v695 = vpop.permute.xlu0 %694
  %698 = vset.pattern.permute.xlu0 16
  %699 = vperm.xlu0 %698, %v572
  %v700 = vpop.permute.xlu0 %699
  %703 = vset.pattern.permute.xlu0 16
  %704 = vperm.xlu0 %703, %v574
  %v705 = vpop.permute.xlu0 %704
  %v707 = vsel %vm192, %v552, 0
  %v709 = vsel %vm192, %v554, 0
  %v711 = vsel %vm192, %v556, 0
  %v713 = vsel %vm192, %v558, 0
  %v715 = vsel %vm192, %v560, 0
  %v717 = vsel %vm192, %v562, 0
  %v719 = vsel %vm192, %v564, 0
  %v721 = vsel %vm192, %v566, 0
  %v723 = vsel %vm192, %v568, 0
  %v725 = vsel %vm192, %v570, 0
  %v727 = vsel %vm192, %v572, 0
  %v729 = vsel %vm192, %v574, 0
  %731 = vmatprep.subr.mxu0 %v636
  %732 = vmatpush1.msra.mxu0 %v635
  %733 = vmatprep.subr.mxu0 %v632
  %734 = vmatpush1.msra.mxu0 %v631
  %735 = vmatprep.subr.mxu0 %v628
  %736 = vmatpush1.msra.mxu0 %v627
  %737 = vmatprep.subr.mxu0 %v624
  %738 = vmatpush1.msra.mxu0 %v623
  %739 = vmatprep.subr.mxu0 %v620
  %740 = vmatpush1.msra.mxu0 %v619
  %741 = vmatprep.subr.mxu0 %v616
  %742 = vmatpush1.msra.mxu0 %v615
  %743 = vmatprep.subr.mxu0 %v612
  %744 = vmatpush1.msra.mxu0 %v611
  %745 = vmatprep.subr.mxu0 %v608
  %746 = vmatpush1.msra.mxu0 %v607
  %747 = vmatprep.subr.mxu0 %v604
  %748 = vmatpush1.msra.mxu0 %v603
  %749 = vmatprep.subr.mxu0 %v600
  %750 = vmatpush1.msra.mxu0 %v599
  %751 = vmatprep.subr.mxu0 %v596
  %752 = vmatpush1.msra.mxu0 %v595
  %753 = vmatprep.subr.mxu0 %v592
  %754 = vmatpush1.msra.mxu0 %v591
  %755 = vmatprep.subr.mxu0 %v588
  %756 = vmatpush1.msra.mxu0 %v587
  %757 = vmatprep.subr.mxu0 %v584
  %758 = vmatpush1.msra.mxu0 %v583
  %759 = vmatprep.subr.mxu0 %v580
  %760 = vmatpush1.msra.mxu0 %v579
  %761 = vmatprep.subr.mxu0 %v576
  %762 = vmatpush1.msra.mxu0 %v575
  %763 = vmatprep.subr.mxu0 0.0
  %764 = vmatpush2.msra.mxu0 0.0
  %765 = vmatprep.subr.mxu0 0.0
  %766 = vmatpush2.msra.mxu0 0.0
  %767 = vmatprep.subr.mxu0 0.0
  %768 = vmatpush2.msra.mxu0 0.0
  %769 = vmatprep.subr.mxu0 0.0
  %770 = vmatpush2.msra.mxu0 0.0
  %771 = vmatprep.subr.mxu0 0.0
  %772 = vmatpush2.msra.mxu0 0.0
  %773 = vmatprep.subr.mxu0 0.0
  %774 = vmatpush2.msra.mxu0 0.0
  %775 = vmatprep.subr.mxu0 0.0
  %776 = vmatpush2.msra.mxu0 0.0
  %777 = vmatprep.subr.mxu0 0.0
  %778 = vmatpush2.msra.mxu0 0.0
  %779 = vmatprep.subr.mxu0 0.0
  %780 = vmatpush2.msra.mxu0 0.0
  %781 = vmatprep.subr.mxu0 0.0
  %782 = vmatpush2.msra.mxu0 0.0
  %783 = vmatprep.subr.mxu0 0.0
  %784 = vmatpush2.msra.mxu0 0.0
  %785 = vmatprep.subr.mxu0 0.0
  %786 = vmatpush2.msra.mxu0 0.0
  %787 = vmatprep.subr.mxu0 0.0
  %788 = vmatpush2.msra.mxu0 0.0
  %789 = vmatprep.subr.mxu0 0.0
  %790 = vmatpush2.msra.mxu0 0.0
  %791 = vmatprep.subr.mxu0 %v644
  %792 = vmatpush2.msra.mxu0 %v643
  %793 = vmatprep.subr.mxu0 %v640
  %794 = vmatpush2.msra.mxu0 %v639
  %795 = vmatprep.mubr.f32.mxu0 %v707
  %796 = vmatmul.mubr.f32.gmra.mxu0 %v551
  %v797 = vpop.f32.mrf.mxu0
  %v798 = vadd.f32 %v650, %v797
  %v799 = vpop.f32.mrf.mxu0
  %v800 = vadd.f32 %v650, %v799
  %801 = vmatprep.mubr.f32.mxu0 %v709
  %802 = vmatmul.mubr.f32.gmra.mxu0 %v553
  %v803 = vpop.f32.mrf.mxu0
  %v804 = vadd.f32 %v655, %v803
  %v805 = vpop.f32.mrf.mxu0
  %v806 = vadd.f32 %v655, %v805
  %807 = vmatprep.mubr.f32.mxu0 %v711
  %808 = vmatmul.mubr.f32.gmra.mxu0 %v555
  %v809 = vpop.f32.mrf.mxu0
  %v810 = vadd.f32 %v660, %v809
  %v811 = vpop.f32.mrf.mxu0
  %v812 = vadd.f32 %v660, %v811
  %813 = vmatprep.mubr.f32.mxu0 %v713
  %814 = vmatmul.mubr.f32.gmra.mxu0 %v557
  %v815 = vpop.f32.mrf.mxu0
  %v816 = vadd.f32 %v665, %v815
  %v817 = vpop.f32.mrf.mxu0
  %v818 = vadd.f32 %v665, %v817
  %819 = vmatprep.mubr.f32.mxu0 %v715
  %820 = vmatmul.mubr.f32.gmra.mxu0 %v559
  %v821 = vpop.f32.mrf.mxu0
  %v822 = vadd.f32 %v670, %v821
  %v823 = vpop.f32.mrf.mxu0
  %v824 = vadd.f32 %v670, %v823
  %825 = vmatprep.mubr.f32.mxu0 %v717
  %826 = vmatmul.mubr.f32.gmra.mxu0 %v561
  %v827 = vpop.f32.mrf.mxu0
  %v828 = vadd.f32 %v675, %v827
  %v829 = vpop.f32.mrf.mxu0
  %v830 = vadd.f32 %v675, %v829
  %831 = vmatprep.mubr.f32.mxu0 %v719
  %832 = vmatmul.mubr.f32.gmra.mxu0 %v563
  %v833 = vpop.f32.mrf.mxu0
  %v834 = vadd.f32 %v680, %v833
  %v835 = vpop.f32.mrf.mxu0
  %v836 = vadd.f32 %v680, %v835
  %837 = vmatprep.mubr.f32.mxu0 %v721
  %838 = vmatmul.mubr.f32.gmra.mxu0 %v565
  %v839 = vpop.f32.mrf.mxu0
  %v840 = vadd.f32 %v685, %v839
  %v841 = vpop.f32.mrf.mxu0
  %v842 = vadd.f32 %v685, %v841
  %843 = vmatprep.mubr.f32.mxu0 %v723
  %844 = vmatmul.mubr.f32.gmra.mxu0 %v567
  %v845 = vpop.f32.mrf.mxu0
  %v846 = vadd.f32 %v690, %v845
  %v847 = vpop.f32.mrf.mxu0
  %v848 = vadd.f32 %v690, %v847
  %849 = vmatprep.mubr.f32.mxu0 %v725
  %850 = vmatmul.mubr.f32.gmra.mxu0 %v569
  %v851 = vpop.f32.mrf.mxu0
  %v852 = vadd.f32 %v695, %v851
  %v853 = vpop.f32.mrf.mxu0
  %v854 = vadd.f32 %v695, %v853
  %855 = vmatprep.mubr.f32.mxu0 %v727
  %856 = vmatmul.mubr.f32.gmra.mxu0 %v571
  %v857 = vpop.f32.mrf.mxu0
  %v858 = vadd.f32 %v700, %v857
  %v859 = vpop.f32.mrf.mxu0
  %v860 = vadd.f32 %v700, %v859
  %861 = vmatprep.mubr.f32.mxu0 %v729
  %862 = vmatmul.mubr.f32.gmra.mxu0 %v573
  %v863 = vpop.f32.mrf.mxu0
  %v864 = vadd.f32 %v705, %v863
  %v865 = vpop.f32.mrf.mxu0
  %v866 = vadd.f32 %v705, %v865
  %867 = vdwg.mxu0
  %868 = vmatprep.subr.mxu0 %v638
  %869 = vmatpush1.msra.mxu0 %v637
  %870 = vmatprep.subr.mxu0 %v634
  %871 = vmatpush1.msra.mxu0 %v633
  %872 = vmatprep.subr.mxu0 %v630
  %873 = vmatpush1.msra.mxu0 %v629
  %874 = vmatprep.subr.mxu0 %v626
  %875 = vmatpush1.msra.mxu0 %v625
  %876 = vmatprep.subr.mxu0 %v622
  %877 = vmatpush1.msra.mxu0 %v621
  %878 = vmatprep.subr.mxu0 %v618
  %879 = vmatpush1.msra.mxu0 %v617
  %880 = vmatprep.subr.mxu0 %v614
  %881 = vmatpush1.msra.mxu0 %v613
  %882 = vmatprep.subr.mxu0 %v610
  %883 = vmatpush1.msra.mxu0 %v609
  %884 = vmatprep.subr.mxu0 %v606
  %885 = vmatpush1.msra.mxu0 %v605
  %886 = vmatprep.subr.mxu0 %v602
  %887 = vmatpush1.msra.mxu0 %v601
  %888 = vmatprep.subr.mxu0 %v598
  %889 = vmatpush1.msra.mxu0 %v597
  %890 = vmatprep.subr.mxu0 %v594
  %891 = vmatpush1.msra.mxu0 %v593
  %892 = vmatprep.subr.mxu0 %v590
  %893 = vmatpush1.msra.mxu0 %v589
  %894 = vmatprep.subr.mxu0 %v586
  %895 = vmatpush1.msra.mxu0 %v585
  %896 = vmatprep.subr.mxu0 %v582
  %897 = vmatpush1.msra.mxu0 %v581
  %898 = vmatprep.subr.mxu0 %v578
  %899 = vmatpush1.msra.mxu0 %v577
  %900 = vmatprep.subr.mxu0 0.0
  %901 = vmatpush2.msra.mxu0 0.0
  %902 = vmatprep.subr.mxu0 0.0
  %903 = vmatpush2.msra.mxu0 0.0
  %904 = vmatprep.subr.mxu0 0.0
  %905 = vmatpush2.msra.mxu0 0.0
  %906 = vmatprep.subr.mxu0 0.0
  %907 = vmatpush2.msra.mxu0 0.0
  %908 = vmatprep.subr.mxu0 0.0
  %909 = vmatpush2.msra.mxu0 0.0
  %910 = vmatprep.subr.mxu0 0.0
  %911 = vmatpush2.msra.mxu0 0.0
  %912 = vmatprep.subr.mxu0 0.0
  %913 = vmatpush2.msra.mxu0 0.0
  %914 = vmatprep.subr.mxu0 0.0
  %915 = vmatpush2.msra.mxu0 0.0
  %916 = vmatprep.subr.mxu0 0.0
  %917 = vmatpush2.msra.mxu0 0.0
  %918 = vmatprep.subr.mxu0 0.0
  %919 = vmatpush2.msra.mxu0 0.0
  %920 = vmatprep.subr.mxu0 0.0
  %921 = vmatpush2.msra.mxu0 0.0
  %922 = vmatprep.subr.mxu0 0.0
  %923 = vmatpush2.msra.mxu0 0.0
  %924 = vmatprep.subr.mxu0 0.0
  %925 = vmatpush2.msra.mxu0 0.0
  %926 = vmatprep.subr.mxu0 0.0
  %927 = vmatpush2.msra.mxu0 0.0
  %928 = vmatprep.subr.mxu0 %v646
  %929 = vmatpush2.msra.mxu0 %v645
  %930 = vmatprep.subr.mxu0 %v642
  %931 = vmatpush2.msra.mxu0 %v641
  %932 = vmatprep.mubr.f32.mxu0 %v707
  %933 = vmatmul.mubr.f32.gmra.mxu0 %v551
  %v934 = vpop.f32.mrf.mxu0
  %v935 = vadd.f32 %v650, %v934
  %v936 = vpop.f32.mrf.mxu0
  %v937 = vadd.f32 %v650, %v936
  %938 = vmatprep.mubr.f32.mxu0 %v709
  %939 = vmatmul.mubr.f32.gmra.mxu0 %v553
  %v940 = vpop.f32.mrf.mxu0
  %v941 = vadd.f32 %v655, %v940
  %v942 = vpop.f32.mrf.mxu0
  %v943 = vadd.f32 %v655, %v942
  %944 = vmatprep.mubr.f32.mxu0 %v711
  %945 = vmatmul.mubr.f32.gmra.mxu0 %v555
  %v946 = vpop.f32.mrf.mxu0
  %v947 = vadd.f32 %v660, %v946
  %v948 = vpop.f32.mrf.mxu0
  %v949 = vadd.f32 %v660, %v948
  %950 = vmatprep.mubr.f32.mxu0 %v713
  %951 = vmatmul.mubr.f32.gmra.mxu0 %v557
  %v952 = vpop.f32.mrf.mxu0
  %v953 = vadd.f32 %v665, %v952
  %v954 = vpop.f32.mrf.mxu0
  %v955 = vadd.f32 %v665, %v954
  %956 = vmatprep.mubr.f32.mxu0 %v715
  %957 = vmatmul.mubr.f32.gmra.mxu0 %v559
  %v958 = vpop.f32.mrf.mxu0
  %v959 = vadd.f32 %v670, %v958
  %v960 = vpop.f32.mrf.mxu0
  %v961 = vadd.f32 %v670, %v960
  %962 = vmatprep.mubr.f32.mxu0 %v717
  %963 = vmatmul.mubr.f32.gmra.mxu0 %v561
  %v964 = vpop.f32.mrf.mxu0
  %v965 = vadd.f32 %v675, %v964
  %v966 = vpop.f32.mrf.mxu0
  %v967 = vadd.f32 %v675, %v966
  %968 = vmatprep.mubr.f32.mxu0 %v719
  %969 = vmatmul.mubr.f32.gmra.mxu0 %v563
  %v970 = vpop.f32.mrf.mxu0
  %v971 = vadd.f32 %v680, %v970
  %v972 = vpop.f32.mrf.mxu0
  %v973 = vadd.f32 %v680, %v972
  %974 = vmatprep.mubr.f32.mxu0 %v721
  %975 = vmatmul.mubr.f32.gmra.mxu0 %v565
  %v976 = vpop.f32.mrf.mxu0
  %v977 = vadd.f32 %v685, %v976
  %v978 = vpop.f32.mrf.mxu0
  %v979 = vadd.f32 %v685, %v978
  %980 = vmatprep.mubr.f32.mxu0 %v723
  %981 = vmatmul.mubr.f32.gmra.mxu0 %v567
  %v982 = vpop.f32.mrf.mxu0
  %v983 = vadd.f32 %v690, %v982
  %v984 = vpop.f32.mrf.mxu0
  %v985 = vadd.f32 %v690, %v984
  %986 = vmatprep.mubr.f32.mxu0 %v725
  %987 = vmatmul.mubr.f32.gmra.mxu0 %v569
  %v988 = vpop.f32.mrf.mxu0
  %v989 = vadd.f32 %v695, %v988
  %v990 = vpop.f32.mrf.mxu0
  %v991 = vadd.f32 %v695, %v990
  %992 = vmatprep.mubr.f32.mxu0 %v727
  %993 = vmatmul.mubr.f32.gmra.mxu0 %v571
  %v994 = vpop.f32.mrf.mxu0
  %v995 = vadd.f32 %v700, %v994
  %v996 = vpop.f32.mrf.mxu0
  %v997 = vadd.f32 %v700, %v996
  %998 = vmatprep.mubr.f32.mxu0 %v729
  %999 = vmatmul.mubr.f32.gmra.mxu0 %v573
  %v1000 = vpop.f32.mrf.mxu0
  %v1001 = vadd.f32 %v705, %v1000
  %v1002 = vpop.f32.mrf.mxu0
  %v1003 = vadd.f32 %v705, %v1002
  %1004 = vdwg.mxu0
  %vm1005 = vcmp.gt.f32.partialorder %v798, 0.0
  %vm1006 = vcmp.gt.f32.partialorder %v800, 0.0
  %vm1007 = vcmp.gt.f32.partialorder %v935, 0.0
  %vm1008 = vcmp.gt.f32.partialorder %v937, 0.0
  %vm1009 = vcmp.gt.f32.partialorder %v804, 0.0
  %vm1010 = vcmp.gt.f32.partialorder %v806, 0.0
  %vm1011 = vcmp.gt.f32.partialorder %v941, 0.0
  %vm1012 = vcmp.gt.f32.partialorder %v943, 0.0
  %vm1013 = vcmp.gt.f32.partialorder %v810, 0.0
  %vm1014 = vcmp.gt.f32.partialorder %v812, 0.0
  %vm1015 = vcmp.gt.f32.partialorder %v947, 0.0
  %vm1016 = vcmp.gt.f32.partialorder %v949, 0.0
  %vm1017 = vcmp.gt.f32.partialorder %v816, 0.0
  %vm1018 = vcmp.gt.f32.partialorder %v818, 0.0
  %vm1019 = vcmp.gt.f32.partialorder %v953, 0.0
  %vm1020 = vcmp.gt.f32.partialorder %v955, 0.0
  %vm1021 = vcmp.gt.f32.partialorder %v822, 0.0
  %vm1022 = vcmp.gt.f32.partialorder %v824, 0.0
  %vm1023 = vcmp.gt.f32.partialorder %v959, 0.0
  %vm1024 = vcmp.gt.f32.partialorder %v961, 0.0
  %vm1025 = vcmp.gt.f32.partialorder %v828, 0.0
  %vm1026 = vcmp.gt.f32.partialorder %v830, 0.0
  %vm1027 = vcmp.gt.f32.partialorder %v965, 0.0
  %vm1028 = vcmp.gt.f32.partialorder %v967, 0.0
  %vm1029 = vcmp.gt.f32.partialorder %v834, 0.0
  %vm1030 = vcmp.gt.f32.partialorder %v836, 0.0
  %vm1031 = vcmp.gt.f32.partialorder %v971, 0.0
  %vm1032 = vcmp.gt.f32.partialorder %v973, 0.0
  %vm1033 = vcmp.gt.f32.partialorder %v840, 0.0
  %vm1034 = vcmp.gt.f32.partialorder %v842, 0.0
  %vm1035 = vcmp.gt.f32.partialorder %v977, 0.0
  %vm1036 = vcmp.gt.f32.partialorder %v979, 0.0
  %vm1037 = vcmp.gt.f32.partialorder %v846, 0.0
  %vm1038 = vcmp.gt.f32.partialorder %v848, 0.0
  %vm1039 = vcmp.gt.f32.partialorder %v983, 0.0
  %vm1040 = vcmp.gt.f32.partialorder %v985, 0.0
  %vm1041 = vcmp.gt.f32.partialorder %v852, 0.0
  %vm1042 = vcmp.gt.f32.partialorder %v854, 0.0
  %vm1043 = vcmp.gt.f32.partialorder %v989, 0.0
  %vm1044 = vcmp.gt.f32.partialorder %v991, 0.0
  %vm1045 = vcmp.gt.f32.partialorder %v858, 0.0
  %vm1046 = vcmp.gt.f32.partialorder %v860, 0.0
  %vm1047 = vcmp.gt.f32.partialorder %v995, 0.0
  %vm1048 = vcmp.gt.f32.partialorder %v997, 0.0
  %vm1049 = vcmp.gt.f32.partialorder %v864, 0.0
  %vm1050 = vcmp.gt.f32.partialorder %v866, 0.0
  %vm1051 = vcmp.gt.f32.partialorder %v1001, 0.0
  %vm1052 = vcmp.gt.f32.partialorder %v1003, 0.0
  %v1053 = vmul.f32 %v798, 0.2
  %v1054 = vmul.f32 %v800, 0.2
  %v1055 = vmul.f32 %v935, 0.2
  %v1056 = vmul.f32 %v937, 0.2
  %v1057 = vmul.f32 %v804, 0.2
  %v1058 = vmul.f32 %v806, 0.2
  %v1059 = vmul.f32 %v941, 0.2
  %v1060 = vmul.f32 %v943, 0.2
  %v1061 = vmul.f32 %v810, 0.2
  %v1062 = vmul.f32 %v812, 0.2
  %v1063 = vmul.f32 %v947, 0.2
  %v1064 = vmul.f32 %v949, 0.2
  %v1065 = vmul.f32 %v816, 0.2
  %v1066 = vmul.f32 %v818, 0.2
  %v1067 = vmul.f32 %v953, 0.2
  %v1068 = vmul.f32 %v955, 0.2
  %v1069 = vmul.f32 %v822, 0.2
  %v1070 = vmul.f32 %v824, 0.2
  %v1071 = vmul.f32 %v959, 0.2
  %v1072 = vmul.f32 %v961, 0.2
  %v1073 = vmul.f32 %v828, 0.2
  %v1074 = vmul.f32 %v830, 0.2
  %v1075 = vmul.f32 %v965, 0.2
  %v1076 = vmul.f32 %v967, 0.2
  %v1077 = vmul.f32 %v834, 0.2
  %v1078 = vmul.f32 %v836, 0.2
  %v1079 = vmul.f32 %v971, 0.2
  %v1080 = vmul.f32 %v973, 0.2
  %v1081 = vmul.f32 %v840, 0.2
  %v1082 = vmul.f32 %v842, 0.2
  %v1083 = vmul.f32 %v977, 0.2
  %v1084 = vmul.f32 %v979, 0.2
  %v1085 = vmul.f32 %v846, 0.2
  %v1086 = vmul.f32 %v848, 0.2
  %v1087 = vmul.f32 %v983, 0.2
  %v1088 = vmul.f32 %v985, 0.2
  %v1089 = vmul.f32 %v852, 0.2
  %v1090 = vmul.f32 %v854, 0.2
  %v1091 = vmul.f32 %v989, 0.2
  %v1092 = vmul.f32 %v991, 0.2
  %v1093 = vmul.f32 %v858, 0.2
  %v1094 = vmul.f32 %v860, 0.2
  %v1095 = vmul.f32 %v995, 0.2
  %v1096 = vmul.f32 %v997, 0.2
  %v1097 = vmul.f32 %v864, 0.2
  %v1098 = vmul.f32 %v866, 0.2
  %v1099 = vmul.f32 %v1001, 0.2
  %v1100 = vmul.f32 %v1003, 0.2
  %v1101 = vsel %vm1005, %v798, %v1053
  %v1102 = vsel %vm1006, %v800, %v1054
  %v1103 = vsel %vm1007, %v935, %v1055
  %v1104 = vsel %vm1008, %v937, %v1056
  %v1105 = vsel %vm1009, %v804, %v1057
  %v1106 = vsel %vm1010, %v806, %v1058
  %v1107 = vsel %vm1011, %v941, %v1059
  %v1108 = vsel %vm1012, %v943, %v1060
  %v1109 = vsel %vm1013, %v810, %v1061
  %v1110 = vsel %vm1014, %v812, %v1062
  %v1111 = vsel %vm1015, %v947, %v1063
  %v1112 = vsel %vm1016, %v949, %v1064
  %v1113 = vsel %vm1017, %v816, %v1065
  %v1114 = vsel %vm1018, %v818, %v1066
  %v1115 = vsel %vm1019, %v953, %v1067
  %v1116 = vsel %vm1020, %v955, %v1068
  %v1117 = vsel %vm1021, %v822, %v1069
  %v1118 = vsel %vm1022, %v824, %v1070
  %v1119 = vsel %vm1023, %v959, %v1071
  %v1120 = vsel %vm1024, %v961, %v1072
  %v1121 = vsel %vm1025, %v828, %v1073
  %v1122 = vsel %vm1026, %v830, %v1074
  %v1123 = vsel %vm1027, %v965, %v1075
  %v1124 = vsel %vm1028, %v967, %v1076
  %v1125 = vsel %vm1029, %v834, %v1077
  %v1126 = vsel %vm1030, %v836, %v1078
  %v1127 = vsel %vm1031, %v971, %v1079
  %v1128 = vsel %vm1032, %v973, %v1080
  %v1129 = vsel %vm1033, %v840, %v1081
  %v1130 = vsel %vm1034, %v842, %v1082
  %v1131 = vsel %vm1035, %v977, %v1083
  %v1132 = vsel %vm1036, %v979, %v1084
  %v1133 = vsel %vm1037, %v846, %v1085
  %v1134 = vsel %vm1038, %v848, %v1086
  %v1135 = vsel %vm1039, %v983, %v1087
  %v1136 = vsel %vm1040, %v985, %v1088
  %v1137 = vsel %vm1041, %v852, %v1089
  %v1138 = vsel %vm1042, %v854, %v1090
  %v1139 = vsel %vm1043, %v989, %v1091
  %v1140 = vsel %vm1044, %v991, %v1092
  %v1141 = vsel %vm1045, %v858, %v1093
  %v1142 = vsel %vm1046, %v860, %v1094
  %v1143 = vsel %vm1047, %v995, %v1095
  %v1144 = vsel %vm1048, %v997, %v1096
  %v1145 = vsel %vm1049, %v864, %v1097
  %v1146 = vsel %vm1050, %v866, %v1098
  %v1147 = vsel %vm1051, %v1001, %v1099
  %v1148 = vsel %vm1052, %v1003, %v1100
  %1149 = vst [vmem:[#allocation4] sm:$0xff] %v1101
  %1150 = vst [vmem:[#allocation4 + $0x8] sm:$0xff] %v1102
  %1151 = vst [vmem:[#allocation4 + $0x10] sm:$0xff] %v1103
  %1152 = vst [vmem:[#allocation4 + $0x18] sm:$0xff] %v1104
  %1153 = vst [vmem:[#allocation4 + $0x20] sm:$0xff] %v1105
  %1154 = vst [vmem:[#allocation4 + $0x28] sm:$0xff] %v1106
  %1155 = vst [vmem:[#allocation4 + $0x30] sm:$0xff] %v1107
  %1156 = vst [vmem:[#allocation4 + $0x38] sm:$0xff] %v1108
  %1157 = vst [vmem:[#allocation4 + $0x40] sm:$0xff] %v1109
  %1158 = vst [vmem:[#allocation4 + $0x48] sm:$0xff] %v1110
  %1159 = vst [vmem:[#allocation4 + $0x50] sm:$0xff] %v1111
  %1160 = vst [vmem:[#allocation4 + $0x58] sm:$0xff] %v1112
  %1161 = vst [vmem:[#allocation4 + $0x60] sm:$0xff] %v1113
  %1162 = vst [vmem:[#allocation4 + $0x68] sm:$0xff] %v1114
  %1163 = vst [vmem:[#allocation4 + $0x70] sm:$0xff] %v1115
  %1164 = vst [vmem:[#allocation4 + $0x78] sm:$0xff] %v1116
  %1165 = vst [vmem:[#allocation4 + $0x80] sm:$0xff] %v1117
  %1166 = vst [vmem:[#allocation4 + $0x88] sm:$0xff] %v1118
  %1167 = vst [vmem:[#allocation4 + $0x90] sm:$0xff] %v1119
  %1168 = vst [vmem:[#allocation4 + $0x98] sm:$0xff] %v1120
  %1169 = vst [vmem:[#allocation4 + $0xa0] sm:$0xff] %v1121
  %1170 = vst [vmem:[#allocation4 + $0xa8] sm:$0xff] %v1122
  %1171 = vst [vmem:[#allocation4 + $0xb0] sm:$0xff] %v1123
  %1172 = vst [vmem:[#allocation4 + $0xb8] sm:$0xff] %v1124
  %1173 = vst [vmem:[#allocation4 + $0xc0] sm:$0xff] %v1125
  %1174 = vst [vmem:[#allocation4 + $0xc8] sm:$0xff] %v1126
  %1175 = vst [vmem:[#allocation4 + $0xd0] sm:$0xff] %v1127
  %1176 = vst [vmem:[#allocation4 + $0xd8] sm:$0xff] %v1128
  %1177 = vst [vmem:[#allocation4 + $0xe0] sm:$0xff] %v1129
  %1178 = vst [vmem:[#allocation4 + $0xe8] sm:$0xff] %v1130
  %1179 = vst [vmem:[#allocation4 + $0xf0] sm:$0xff] %v1131
  %1180 = vst [vmem:[#allocation4 + $0xf8] sm:$0xff] %v1132
  %1181 = vst [vmem:[#allocation4 + $0x100] sm:$0xff] %v1133
  %1182 = vst [vmem:[#allocation4 + $0x108] sm:$0xff] %v1134
  %1183 = vst [vmem:[#allocation4 + $0x110] sm:$0xff] %v1135
  %1184 = vst [vmem:[#allocation4 + $0x118] sm:$0xff] %v1136
  %1185 = vst [vmem:[#allocation4 + $0x120] sm:$0xff] %v1137
  %1186 = vst [vmem:[#allocation4 + $0x128] sm:$0xff] %v1138
  %1187 = vst [vmem:[#allocation4 + $0x130] sm:$0xff] %v1139
  %1188 = vst [vmem:[#allocation4 + $0x138] sm:$0xff] %v1140
  %1189 = vst [vmem:[#allocation4 + $0x140] sm:$0xff] %v1141
  %1190 = vst [vmem:[#allocation4 + $0x148] sm:$0xff] %v1142
  %1191 = vst [vmem:[#allocation4 + $0x150] sm:$0xff] %v1143
  %1192 = vst [vmem:[#allocation4 + $0x158] sm:$0xff] %v1144
  %1193 = vst [vmem:[#allocation4 + $0x160] sm:$0xff] %v1145
  %1194 = vst [vmem:[#allocation4 + $0x168] sm:$0xff] %v1146
  %1195 = vst [vmem:[#allocation4 + $0x170] sm:$0xff] %v1147
  %1196 = vst [vmem:[#allocation4 + $0x178] sm:$0xff] %v1148
  %v1197 = vld [vmem:[%s3 + $0x8] sm:$0xff]
  %v1198 = vld [vmem:[%s3 + $0x18] sm:$0xff]
  %v1199 = vld [vmem:[%s3 + $0x28] sm:$0xff]
  %v1200 = vld [vmem:[%s3 + $0x38] sm:$0xff]
  %v1201 = vld [vmem:[%s3 + $0x48] sm:$0xff]
  %v1202 = vld [vmem:[%s3 + $0x58] sm:$0xff]
  %v1203 = vld [vmem:[%s3 + $0x68] sm:$0xff]
  %v1204 = vld [vmem:[%s3 + $0x78] sm:$0xff]
  %v1205 = vld [vmem:[%s3 + $0x88] sm:$0xff]
  %v1206 = vld [vmem:[%s3 + $0x98] sm:$0xff]
  %v1207 = vld [vmem:[%s3 + $0xa8] sm:$0xff]
  %v1208 = vld [vmem:[%s3 + $0xb8] sm:$0xff]
  %v1209 = vadd.f32 %v1101, %v1102
  %1210 = vadd.xlane.f32.xlu0 %v1209
  %v1211 = vpop.xlane.xlu0 %1210
  %v1212 = vadd.f32 %v1105, %v1106
  %1213 = vadd.xlane.f32.xlu0 %v1212
  %v1214 = vpop.xlane.xlu0 %1213
  %v1215 = vadd.f32 %v1109, %v1110
  %1216 = vadd.xlane.f32.xlu0 %v1215
  %v1217 = vpop.xlane.xlu0 %1216
  %v1218 = vadd.f32 %v1113, %v1114
  %1219 = vadd.xlane.f32.xlu0 %v1218
  %v1220 = vpop.xlane.xlu0 %1219
  %v1221 = vadd.f32 %v1117, %v1118
  %1222 = vadd.xlane.f32.xlu0 %v1221
  %v1223 = vpop.xlane.xlu0 %1222
  %v1224 = vadd.f32 %v1121, %v1122
  %1225 = vadd.xlane.f32.xlu0 %v1224
  %v1226 = vpop.xlane.xlu0 %1225
  %v1227 = vadd.f32 %v1125, %v1126
  %1228 = vadd.xlane.f32.xlu0 %v1227
  %v1229 = vpop.xlane.xlu0 %1228
  %v1230 = vadd.f32 %v1129, %v1130
  %1231 = vadd.xlane.f32.xlu0 %v1230
  %v1232 = vpop.xlane.xlu0 %1231
  %v1233 = vadd.f32 %v1133, %v1134
  %1234 = vadd.xlane.f32.xlu0 %v1233
  %v1235 = vpop.xlane.xlu0 %1234
  %v1236 = vadd.f32 %v1137, %v1138
  %1237 = vadd.xlane.f32.xlu0 %v1236
  %v1238 = vpop.xlane.xlu0 %1237
  %v1239 = vadd.f32 %v1141, %v1142
  %1240 = vadd.xlane.f32.xlu0 %v1239
  %v1241 = vpop.xlane.xlu0 %1240
  %v1242 = vadd.f32 %v1145, %v1146
  %1243 = vadd.xlane.f32.xlu0 %v1242
  %v1244 = vpop.xlane.xlu0 %1243
  %v1245 = vmul.f32 %v1211, 0.00390625
  %v1246 = vmul.f32 %v1214, 0.00390625
  %v1247 = vmul.f32 %v1217, 0.00390625
  %v1248 = vmul.f32 %v1220, 0.00390625
  %v1249 = vmul.f32 %v1223, 0.00390625
  %v1250 = vmul.f32 %v1226, 0.00390625
  %v1251 = vmul.f32 %v1229, 0.00390625
  %v1252 = vmul.f32 %v1232, 0.00390625
  %v1253 = vmul.f32 %v1235, 0.00390625
  %v1254 = vmul.f32 %v1238, 0.00390625
  %v1255 = vmul.f32 %v1241, 0.00390625
  %v1256 = vmul.f32 %v1244, 0.00390625
  %v1257 = vmul.f32 %v1197, %v1245
  %v1258 = vmul.f32 %v1198, %v1246
  %v1259 = vmul.f32 %v1199, %v1247
  %v1260 = vmul.f32 %v1200, %v1248
  %v1261 = vmul.f32 %v1201, %v1249
  %v1262 = vmul.f32 %v1202, %v1250
  %v1263 = vmul.f32 %v1203, %v1251
  %v1264 = vmul.f32 %v1204, %v1252
  %v1265 = vmul.f32 %v1205, %v1253
  %v1266 = vmul.f32 %v1206, %v1254
  %v1267 = vmul.f32 %v1207, %v1255
  %v1268 = vmul.f32 %v1208, %v1256
  %vm1269 = vcmask 187528
  %v1270 = vsel %vm1269, %v1257, 0.0
  %v1271 = vsel %vm1269, %v1258, 0.0
  %v1272 = vadd.f32 %v1270, %v1271
  %v1273 = vsel %vm1269, %v1259, 0.0
  %v1274 = vadd.f32 %v1272, %v1273
  %v1275 = vsel %vm1269, %v1260, 0.0
  %v1276 = vadd.f32 %v1274, %v1275
  %v1277 = vsel %vm1269, %v1261, 0.0
  %v1278 = vadd.f32 %v1276, %v1277
  %v1279 = vsel %vm1269, %v1262, 0.0
  %v1280 = vadd.f32 %v1278, %v1279
  %v1281 = vsel %vm1269, %v1263, 0.0
  %v1282 = vadd.f32 %v1280, %v1281
  %v1283 = vsel %vm1269, %v1264, 0.0
  %v1284 = vadd.f32 %v1282, %v1283
  %v1285 = vsel %vm1269, %v1265, 0.0
  %v1286 = vadd.f32 %v1284, %v1285
  %v1287 = vsel %vm1269, %v1266, 0.0
  %v1288 = vadd.f32 %v1286, %v1287
  %v1289 = vsel %vm1269, %v1267, 0.0
  %v1290 = vadd.f32 %v1288, %v1289
  %v1291 = vsel %vm1269, %v1268, 0.0
  %v1292 = vadd.f32 %v1290, %v1291
  %v1293 = vrot.slane %v1292, 4
  %v1294 = vadd.f32 %v1292, %v1293
  %v1295 = vrot.slane %v1294, 2
  %v1296 = vadd.f32 %v1294, %v1295
  %v1297 = vrot.slane %v1296, 1
  %v1298 = vadd.f32 %v1296, %v1297
  %v1299 = vmax.f32 %v1298, 0.0
  %1301 = vrot.lane.b32.xlu0 %v1299, 6
  %v1302 = vpop.permute.xlu0 %1301
  %v1304 = vmul.f32 %v1197, %v1302
  %v1305 = vmul.f32 %v1198, %v1302
  %v1306 = vmul.f32 %v1199, %v1302
  %v1307 = vmul.f32 %v1200, %v1302
  %v1308 = vmul.f32 %v1201, %v1302
  %v1309 = vmul.f32 %v1202, %v1302
  %v1310 = vmul.f32 %v1203, %v1302
  %v1311 = vmul.f32 %v1204, %v1302
  %v1312 = vmul.f32 %v1205, %v1302
  %v1313 = vmul.f32 %v1206, %v1302
  %v1314 = vmul.f32 %v1207, %v1302
  %v1315 = vmul.f32 %v1208, %v1302
  %1328 = vrot.lane.b32.xlu0 %v1304, 105
  %v1329 = vpop.permute.xlu0 %1328
  %1330 = vrot.lane.b32.xlu0 %v1305, 105
  %v1331 = vpop.permute.xlu0 %1330
  %1332 = vrot.lane.b32.xlu0 %v1306, 105
  %v1333 = vpop.permute.xlu0 %1332
  %1334 = vrot.lane.b32.xlu0 %v1307, 105
  %v1335 = vpop.permute.xlu0 %1334
  %1336 = vrot.lane.b32.xlu0 %v1308, 105
  %v1337 = vpop.permute.xlu0 %1336
  %1338 = vrot.lane.b32.xlu0 %v1309, 105
  %v1339 = vpop.permute.xlu0 %1338
  %1340 = vrot.lane.b32.xlu0 %v1310, 105
  %v1341 = vpop.permute.xlu0 %1340
  %1342 = vrot.lane.b32.xlu0 %v1311, 105
  %v1343 = vpop.permute.xlu0 %1342
  %1344 = vrot.lane.b32.xlu0 %v1312, 105
  %v1345 = vpop.permute.xlu0 %1344
  %1346 = vrot.lane.b32.xlu0 %v1313, 105
  %v1347 = vpop.permute.xlu0 %1346
  %1348 = vrot.lane.b32.xlu0 %v1314, 105
  %v1349 = vpop.permute.xlu0 %1348
  %1350 = vrot.lane.b32.xlu0 %v1315, 105
  %v1351 = vpop.permute.xlu0 %1350
  %vm1364 = vcmask 48128
  %v1365 = vsel %vm1364, %v1329, 0.0
  %1366 = vadd.xlane.f32.xlu0 %v1365
  %v1367 = vpop.xlane.xlu0 %1366
  %v1368 = vsel %vm1364, %v1331, 0.0
  %1369 = vadd.xlane.f32.xlu0 %v1368
  %v1370 = vpop.xlane.xlu0 %1369
  %v1371 = vsel %vm1364, %v1333, 0.0
  %1372 = vadd.xlane.f32.xlu0 %v1371
  %v1373 = vpop.xlane.xlu0 %1372
  %v1374 = vsel %vm1364, %v1335, 0.0
  %1375 = vadd.xlane.f32.xlu0 %v1374
  %v1376 = vpop.xlane.xlu0 %1375
  %v1377 = vsel %vm1364, %v1337, 0.0
  %1378 = vadd.xlane.f32.xlu0 %v1377
  %v1379 = vpop.xlane.xlu0 %1378
  %v1380 = vsel %vm1364, %v1339, 0.0
  %1381 = vadd.xlane.f32.xlu0 %v1380
  %v1382 = vpop.xlane.xlu0 %1381
  %v1383 = vsel %vm1364, %v1341, 0.0
  %1384 = vadd.xlane.f32.xlu0 %v1383
  %v1385 = vpop.xlane.xlu0 %1384
  %v1386 = vsel %vm1364, %v1343, 0.0
  %1387 = vadd.xlane.f32.xlu0 %v1386
  %v1388 = vpop.xlane.xlu0 %1387
  %v1389 = vsel %vm1364, %v1345, 0.0
  %1390 = vadd.xlane.f32.xlu0 %v1389
  %v1391 = vpop.xlane.xlu0 %1390
  %v1392 = vsel %vm1364, %v1347, 0.0
  %1393 = vadd.xlane.f32.xlu0 %v1392
  %v1394 = vpop.xlane.xlu0 %1393
  %v1395 = vsel %vm1364, %v1349, 0.0
  %1396 = vadd.xlane.f32.xlu0 %v1395
  %v1397 = vpop.xlane.xlu0 %1396
  %v1398 = vsel %vm1364, %v1351, 0.0
  %1399 = vadd.xlane.f32.xlu0 %v1398
  %v1400 = vpop.xlane.xlu0 %1399
  %v1401 = vxor.u32 %v1367, 2147483648
  %v1402 = vxor.u32 %v1370, 2147483648
  %v1403 = vxor.u32 %v1373, 2147483648
  %v1404 = vxor.u32 %v1376, 2147483648
  %v1405 = vxor.u32 %v1379, 2147483648
  %v1406 = vxor.u32 %v1382, 2147483648
  %v1407 = vxor.u32 %v1385, 2147483648
  %v1408 = vxor.u32 %v1388, 2147483648
  %v1409 = vxor.u32 %v1391, 2147483648
  %v1410 = vxor.u32 %v1394, 2147483648
  %v1411 = vxor.u32 %v1397, 2147483648
  %v1412 = vxor.u32 %v1400, 2147483648
  %v1413 = vmul.f32 %v1401, 1.442695
  %v1414 = vpow.pop %v1413
  %v1415 = vmul.f32 %v1402, 1.442695
  %v1416 = vpow.pop %v1415
  %v1417 = vmul.f32 %v1403, 1.442695
  %v1418 = vpow.pop %v1417
  %v1419 = vmul.f32 %v1404, 1.442695
  %v1420 = vpow.pop %v1419
  %v1421 = vmul.f32 %v1405, 1.442695
  %v1422 = vpow.pop %v1421
  %v1423 = vmul.f32 %v1406, 1.442695
  %v1424 = vpow.pop %v1423
  %v1425 = vmul.f32 %v1407, 1.442695
  %v1426 = vpow.pop %v1425
  %v1427 = vmul.f32 %v1408, 1.442695
  %v1428 = vpow.pop %v1427
  %v1429 = vmul.f32 %v1409, 1.442695
  %v1430 = vpow.pop %v1429
  %v1431 = vmul.f32 %v1410, 1.442695
  %v1432 = vpow.pop %v1431
  %v1433 = vmul.f32 %v1411, 1.442695
  %v1434 = vpow.pop %v1433
  %v1435 = vmul.f32 %v1412, 1.442695
  %v1436 = vpow.pop %v1435
  %v1437 = vadd.f32 %v1414, 1.0
  %v1438 = vadd.f32 %v1416, 1.0
  %v1439 = vadd.f32 %v1418, 1.0
  %v1440 = vadd.f32 %v1420, 1.0
  %v1441 = vadd.f32 %v1422, 1.0
  %v1442 = vadd.f32 %v1424, 1.0
  %v1443 = vadd.f32 %v1426, 1.0
  %v1444 = vadd.f32 %v1428, 1.0
  %v1445 = vadd.f32 %v1430, 1.0
  %v1446 = vadd.f32 %v1432, 1.0
  %v1447 = vadd.f32 %v1434, 1.0
  %v1448 = vadd.f32 %v1436, 1.0
  %v1449 = vrcp.pop %v1437
  %v1450 = vmul.f32 1.0, %v1449
  %v1451 = vrcp.pop %v1438
  %v1452 = vmul.f32 1.0, %v1451
  %v1453 = vrcp.pop %v1439
  %v1454 = vmul.f32 1.0, %v1453
  %v1455 = vrcp.pop %v1440
  %v1456 = vmul.f32 1.0, %v1455
  %v1457 = vrcp.pop %v1441
  %v1458 = vmul.f32 1.0, %v1457
  %v1459 = vrcp.pop %v1442
  %v1460 = vmul.f32 1.0, %v1459
  %v1461 = vrcp.pop %v1443
  %v1462 = vmul.f32 1.0, %v1461
  %v1463 = vrcp.pop %v1444
  %v1464 = vmul.f32 1.0, %v1463
  %v1465 = vrcp.pop %v1445
  %v1466 = vmul.f32 1.0, %v1465
  %v1467 = vrcp.pop %v1446
  %v1468 = vmul.f32 1.0, %v1467
  %v1469 = vrcp.pop %v1447
  %v1470 = vmul.f32 1.0, %v1469
  %v1471 = vrcp.pop %v1448
  %v1472 = vmul.f32 1.0, %v1471
  %v1473 = vadd.f32 %v1103, %v1104
  %1474 = vadd.xlane.f32.xlu0 %v1473
  %v1475 = vpop.xlane.xlu0 %1474
  %v1476 = vadd.f32 %v1107, %v1108
  %1477 = vadd.xlane.f32.xlu0 %v1476
  %v1478 = vpop.xlane.xlu0 %1477
  %v1479 = vadd.f32 %v1111, %v1112
  %1480 = vadd.xlane.f32.xlu0 %v1479
  %v1481 = vpop.xlane.xlu0 %1480
  %v1482 = vadd.f32 %v1115, %v1116
  %1483 = vadd.xlane.f32.xlu0 %v1482
  %v1484 = vpop.xlane.xlu0 %1483
  %v1485 = vadd.f32 %v1119, %v1120
  %1486 = vadd.xlane.f32.xlu0 %v1485
  %v1487 = vpop.xlane.xlu0 %1486
  %v1488 = vadd.f32 %v1123, %v1124
  %1489 = vadd.xlane.f32.xlu0 %v1488
  %v1490 = vpop.xlane.xlu0 %1489
  %v1491 = vadd.f32 %v1127, %v1128
  %1492 = vadd.xlane.f32.xlu0 %v1491
  %v1493 = vpop.xlane.xlu0 %1492
  %v1494 = vadd.f32 %v1131, %v1132
  %1495 = vadd.xlane.f32.xlu0 %v1494
  %v1496 = vpop.xlane.xlu0 %1495
  %v1497 = vadd.f32 %v1135, %v1136
  %1498 = vadd.xlane.f32.xlu0 %v1497
  %v1499 = vpop.xlane.xlu0 %1498
  %v1500 = vadd.f32 %v1139, %v1140
  %1501 = vadd.xlane.f32.xlu0 %v1500
  %v1502 = vpop.xlane.xlu0 %1501
  %v1503 = vadd.f32 %v1143, %v1144
  %1504 = vadd.xlane.f32.xlu0 %v1503
  %v1505 = vpop.xlane.xlu0 %1504
  %v1506 = vadd.f32 %v1147, %v1148
  %1507 = vadd.xlane.f32.xlu0 %v1506
  %v1508 = vpop.xlane.xlu0 %1507
  %v1509 = vmul.f32 %v1475, 0.00390625
  %v1510 = vmul.f32 %v1478, 0.00390625
  %v1511 = vmul.f32 %v1481, 0.00390625
  %v1512 = vmul.f32 %v1484, 0.00390625
  %v1513 = vmul.f32 %v1487, 0.00390625
  %v1514 = vmul.f32 %v1490, 0.00390625
  %v1515 = vmul.f32 %v1493, 0.00390625
  %v1516 = vmul.f32 %v1496, 0.00390625
  %v1517 = vmul.f32 %v1499, 0.00390625
  %v1518 = vmul.f32 %v1502, 0.00390625
  %v1519 = vmul.f32 %v1505, 0.00390625
  %v1520 = vmul.f32 %v1508, 0.00390625
  %v1521 = vmul.f32 %v1197, %v1509
  %v1522 = vmul.f32 %v1198, %v1510
  %v1523 = vmul.f32 %v1199, %v1511
  %v1524 = vmul.f32 %v1200, %v1512
  %v1525 = vmul.f32 %v1201, %v1513
  %v1526 = vmul.f32 %v1202, %v1514
  %v1527 = vmul.f32 %v1203, %v1515
  %v1528 = vmul.f32 %v1204, %v1516
  %v1529 = vmul.f32 %v1205, %v1517
  %v1530 = vmul.f32 %v1206, %v1518
  %v1531 = vmul.f32 %v1207, %v1519
  %v1532 = vmul.f32 %v1208, %v1520
  %v1533 = vsel %vm1269, %v1521, 0.0
  %v1534 = vsel %vm1269, %v1522, 0.0
  %v1535 = vadd.f32 %v1533, %v1534
  %v1536 = vsel %vm1269, %v1523, 0.0
  %v1537 = vadd.f32 %v1535, %v1536
  %v1538 = vsel %vm1269, %v1524, 0.0
  %v1539 = vadd.f32 %v1537, %v1538
  %v1540 = vsel %vm1269, %v1525, 0.0
  %v1541 = vadd.f32 %v1539, %v1540
  %v1542 = vsel %vm1269, %v1526, 0.0
  %v1543 = vadd.f32 %v1541, %v1542
  %v1544 = vsel %vm1269, %v1527, 0.0
  %v1545 = vadd.f32 %v1543, %v1544
  %v1546 = vsel %vm1269, %v1528, 0.0
  %v1547 = vadd.f32 %v1545, %v1546
  %v1548 = vsel %vm1269, %v1529, 0.0
  %v1549 = vadd.f32 %v1547, %v1548
  %v1550 = vsel %vm1269, %v1530, 0.0
  %v1551 = vadd.f32 %v1549, %v1550
  %v1552 = vsel %vm1269, %v1531, 0.0
  %v1553 = vadd.f32 %v1551, %v1552
  %v1554 = vsel %vm1269, %v1532, 0.0
  %v1555 = vadd.f32 %v1553, %v1554
  %v1556 = vrot.slane %v1555, 4
  %v1557 = vadd.f32 %v1555, %v1556
  %v1558 = vrot.slane %v1557, 2
  %v1559 = vadd.f32 %v1557, %v1558
  %v1560 = vrot.slane %v1559, 1
  %v1561 = vadd.f32 %v1559, %v1560
  %v1562 = vmax.f32 %v1561, 0.0
  %1564 = vrot.lane.b32.xlu0 %v1562, 6
  %v1565 = vpop.permute.xlu0 %1564
  %v1567 = vmul.f32 %v1197, %v1565
  %v1568 = vmul.f32 %v1198, %v1565
  %v1569 = vmul.f32 %v1199, %v1565
  %v1570 = vmul.f32 %v1200, %v1565
  %v1571 = vmul.f32 %v1201, %v1565
  %v1572 = vmul.f32 %v1202, %v1565
  %v1573 = vmul.f32 %v1203, %v1565
  %v1574 = vmul.f32 %v1204, %v1565
  %v1575 = vmul.f32 %v1205, %v1565
  %v1576 = vmul.f32 %v1206, %v1565
  %v1577 = vmul.f32 %v1207, %v1565
  %v1578 = vmul.f32 %v1208, %v1565
  %1591 = vrot.lane.b32.xlu0 %v1567, 105
  %v1592 = vpop.permute.xlu0 %1591
  %1593 = vrot.lane.b32.xlu0 %v1568, 105
  %v1594 = vpop.permute.xlu0 %1593
  %1595 = vrot.lane.b32.xlu0 %v1569, 105
  %v1596 = vpop.permute.xlu0 %1595
  %1597 = vrot.lane.b32.xlu0 %v1570, 105
  %v1598 = vpop.permute.xlu0 %1597
  %1599 = vrot.lane.b32.xlu0 %v1571, 105
  %v1600 = vpop.permute.xlu0 %1599
  %1601 = vrot.lane.b32.xlu0 %v1572, 105
  %v1602 = vpop.permute.xlu0 %1601
  %1603 = vrot.lane.b32.xlu0 %v1573, 105
  %v1604 = vpop.permute.xlu0 %1603
  %1605 = vrot.lane.b32.xlu0 %v1574, 105
  %v1606 = vpop.permute.xlu0 %1605
  %1607 = vrot.lane.b32.xlu0 %v1575, 105
  %v1608 = vpop.permute.xlu0 %1607
  %1609 = vrot.lane.b32.xlu0 %v1576, 105
  %v1610 = vpop.permute.xlu0 %1609
  %1611 = vrot.lane.b32.xlu0 %v1577, 105
  %v1612 = vpop.permute.xlu0 %1611
  %1613 = vrot.lane.b32.xlu0 %v1578, 105
  %v1614 = vpop.permute.xlu0 %1613
  %v1627 = vsel %vm1364, %v1592, 0.0
  %1628 = vadd.xlane.f32.xlu0 %v1627
  %v1629 = vpop.xlane.xlu0 %1628
  %v1630 = vsel %vm1364, %v1594, 0.0
  %1631 = vadd.xlane.f32.xlu0 %v1630
  %v1632 = vpop.xlane.xlu0 %1631
  %v1633 = vsel %vm1364, %v1596, 0.0
  %1634 = vadd.xlane.f32.xlu0 %v1633
  %v1635 = vpop.xlane.xlu0 %1634
  %v1636 = vsel %vm1364, %v1598, 0.0
  %1637 = vadd.xlane.f32.xlu0 %v1636
  %v1638 = vpop.xlane.xlu0 %1637
  %v1639 = vsel %vm1364, %v1600, 0.0
  %1640 = vadd.xlane.f32.xlu0 %v1639
  %v1641 = vpop.xlane.xlu0 %1640
  %v1642 = vsel %vm1364, %v1602, 0.0
  %1643 = vadd.xlane.f32.xlu0 %v1642
  %v1644 = vpop.xlane.xlu0 %1643
  %v1645 = vsel %vm1364, %v1604, 0.0
  %1646 = vadd.xlane.f32.xlu0 %v1645
  %v1647 = vpop.xlane.xlu0 %1646
  %v1648 = vsel %vm1364, %v1606, 0.0
  %1649 = vadd.xlane.f32.xlu0 %v1648
  %v1650 = vpop.xlane.xlu0 %1649
  %v1651 = vsel %vm1364, %v1608, 0.0
  %1652 = vadd.xlane.f32.xlu0 %v1651
  %v1653 = vpop.xlane.xlu0 %1652
  %v1654 = vsel %vm1364, %v1610, 0.0
  %1655 = vadd.xlane.f32.xlu0 %v1654
  %v1656 = vpop.xlane.xlu0 %1655
  %v1657 = vsel %vm1364, %v1612, 0.0
  %1658 = vadd.xlane.f32.xlu0 %v1657
  %v1659 = vpop.xlane.xlu0 %1658
  %v1660 = vsel %vm1364, %v1614, 0.0
  %1661 = vadd.xlane.f32.xlu0 %v1660
  %v1662 = vpop.xlane.xlu0 %1661
  %v1663 = vxor.u32 %v1629, 2147483648
  %v1664 = vxor.u32 %v1632, 2147483648
  %v1665 = vxor.u32 %v1635, 2147483648
  %v1666 = vxor.u32 %v1638, 2147483648
  %v1667 = vxor.u32 %v1641, 2147483648
  %v1668 = vxor.u32 %v1644, 2147483648
  %v1669 = vxor.u32 %v1647, 2147483648
  %v1670 = vxor.u32 %v1650, 2147483648
  %v1671 = vxor.u32 %v1653, 2147483648
  %v1672 = vxor.u32 %v1656, 2147483648
  %v1673 = vxor.u32 %v1659, 2147483648
  %v1674 = vxor.u32 %v1662, 2147483648
  %v1675 = vmul.f32 %v1663, 1.442695
  %v1676 = vpow.pop %v1675
  %v1677 = vmul.f32 %v1664, 1.442695
  %v1678 = vpow.pop %v1677
  %v1679 = vmul.f32 %v1665, 1.442695
  %v1680 = vpow.pop %v1679
  %v1681 = vmul.f32 %v1666, 1.442695
  %v1682 = vpow.pop %v1681
  %v1683 = vmul.f32 %v1667, 1.442695
  %v1684 = vpow.pop %v1683
  %v1685 = vmul.f32 %v1668, 1.442695
  %v1686 = vpow.pop %v1685
  %v1687 = vmul.f32 %v1669, 1.442695
  %v1688 = vpow.pop %v1687
  %v1689 = vmul.f32 %v1670, 1.442695
  %v1690 = vpow.pop %v1689
  %v1691 = vmul.f32 %v1671, 1.442695
  %v1692 = vpow.pop %v1691
  %v1693 = vmul.f32 %v1672, 1.442695
  %v1694 = vpow.pop %v1693
  %v1695 = vmul.f32 %v1673, 1.442695
  %v1696 = vpow.pop %v1695
  %v1697 = vmul.f32 %v1674, 1.442695
  %v1698 = vpow.pop %v1697
  %v1699 = vadd.f32 %v1676, 1.0
  %v1700 = vadd.f32 %v1678, 1.0
  %v1701 = vadd.f32 %v1680, 1.0
  %v1702 = vadd.f32 %v1682, 1.0
  %v1703 = vadd.f32 %v1684, 1.0
  %v1704 = vadd.f32 %v1686, 1.0
  %v1705 = vadd.f32 %v1688, 1.0
  %v1706 = vadd.f32 %v1690, 1.0
  %v1707 = vadd.f32 %v1692, 1.0
  %v1708 = vadd.f32 %v1694, 1.0
  %v1709 = vadd.f32 %v1696, 1.0
  %v1710 = vadd.f32 %v1698, 1.0
  %v1711 = vrcp.pop %v1699
  %v1712 = vmul.f32 1.0, %v1711
  %v1713 = vrcp.pop %v1700
  %v1714 = vmul.f32 1.0, %v1713
  %v1715 = vrcp.pop %v1701
  %v1716 = vmul.f32 1.0, %v1715
  %v1717 = vrcp.pop %v1702
  %v1718 = vmul.f32 1.0, %v1717
  %v1719 = vrcp.pop %v1703
  %v1720 = vmul.f32 1.0, %v1719
  %v1721 = vrcp.pop %v1704
  %v1722 = vmul.f32 1.0, %v1721
  %v1723 = vrcp.pop %v1705
  %v1724 = vmul.f32 1.0, %v1723
  %v1725 = vrcp.pop %v1706
  %v1726 = vmul.f32 1.0, %v1725
  %v1727 = vrcp.pop %v1707
  %v1728 = vmul.f32 1.0, %v1727
  %v1729 = vrcp.pop %v1708
  %v1730 = vmul.f32 1.0, %v1729
  %v1731 = vrcp.pop %v1709
  %v1732 = vmul.f32 1.0, %v1731
  %v1733 = vrcp.pop %v1710
  %v1734 = vmul.f32 1.0, %v1733
  %v1735 = vld [vmem:[#allocation4] sm:$0xff]
  %v1736 = vld [vmem:[#allocation4 + $0x8] sm:$0xff]
  %v1737 = vld [vmem:[#allocation4 + $0x20] sm:$0xff]
  %v1738 = vld [vmem:[#allocation4 + $0x28] sm:$0xff]
  %v1739 = vld [vmem:[#allocation4 + $0x40] sm:$0xff]
  %v1740 = vld [vmem:[#allocation4 + $0x48] sm:$0xff]
  %v1741 = vld [vmem:[#allocation4 + $0x60] sm:$0xff]
  %v1742 = vld [vmem:[#allocation4 + $0x68] sm:$0xff]
  %v1743 = vld [vmem:[#allocation4 + $0x80] sm:$0xff]
  %v1744 = vld [vmem:[#allocation4 + $0x88] sm:$0xff]
  %v1745 = vld [vmem:[#allocation4 + $0xa0] sm:$0xff]
  %v1746 = vld [vmem:[#allocation4 + $0xa8] sm:$0xff]
  %v1747 = vld [vmem:[#allocation4 + $0xc0] sm:$0xff]
  %v1748 = vld [vmem:[#allocation4 + $0xc8] sm:$0xff]
  %v1749 = vld [vmem:[#allocation4 + $0xe0] sm:$0xff]
  %v1750 = vld [vmem:[#allocation4 + $0xe8] sm:$0xff]
  %v1751 = vld [vmem:[#allocation4 + $0x100] sm:$0xff]
  %v1752 = vld [vmem:[#allocation4 + $0x108] sm:$0xff]
  %v1753 = vld [vmem:[#allocation4 + $0x120] sm:$0xff]
  %v1754 = vld [vmem:[#allocation4 + $0x128] sm:$0xff]
  %v1755 = vld [vmem:[#allocation4 + $0x140] sm:$0xff]
  %v1756 = vld [vmem:[#allocation4 + $0x148] sm:$0xff]
  %v1757 = vld [vmem:[#allocation4 + $0x160] sm:$0xff]
  %v1758 = vld [vmem:[#allocation4 + $0x168] sm:$0xff]
  %v1759 = vmul.f32 %v1735, %v1450
  %v1760 = vmul.f32 %v1736, %v1450
  %v1761 = vmul.f32 %v1737, %v1452
  %v1762 = vmul.f32 %v1738, %v1452
  %v1763 = vmul.f32 %v1739, %v1454
  %v1764 = vmul.f32 %v1740, %v1454
  %v1765 = vmul.f32 %v1741, %v1456
  %v1766 = vmul.f32 %v1742, %v1456
  %v1767 = vmul.f32 %v1743, %v1458
  %v1768 = vmul.f32 %v1744, %v1458
  %v1769 = vmul.f32 %v1745, %v1460
  %v1770 = vmul.f32 %v1746, %v1460
  %v1771 = vmul.f32 %v1747, %v1462
  %v1772 = vmul.f32 %v1748, %v1462
  %v1773 = vmul.f32 %v1749, %v1464
  %v1774 = vmul.f32 %v1750, %v1464
  %v1775 = vmul.f32 %v1751, %v1466
  %v1776 = vmul.f32 %v1752, %v1466
  %v1777 = vmul.f32 %v1753, %v1468
  %v1778 = vmul.f32 %v1754, %v1468
  %v1779 = vmul.f32 %v1755, %v1470
  %v1780 = vmul.f32 %v1756, %v1470
  %v1781 = vmul.f32 %v1757, %v1472
  %v1782 = vmul.f32 %v1758, %v1472
  %1783 = vst [vmem:[#allocation4] sm:$0xff] %v1759
  %1784 = vst [vmem:[#allocation4 + $0x8] sm:$0xff] %v1760
  %1785 = vst [vmem:[#allocation4 + $0x20] sm:$0xff] %v1761
  %1786 = vst [vmem:[#allocation4 + $0x28] sm:$0xff] %v1762
  %1787 = vst [vmem:[#allocation4 + $0x40] sm:$0xff] %v1763
  %1788 = vst [vmem:[#allocation4 + $0x48] sm:$0xff] %v1764
  %1789 = vst [vmem:[#allocation4 + $0x60] sm:$0xff] %v1765
  %1790 = vst [vmem:[#allocation4 + $0x68] sm:$0xff] %v1766
  %1791 = vst [vmem:[#allocation4 + $0x80] sm:$0xff] %v1767
  %1792 = vst [vmem:[#allocation4 + $0x88] sm:$0xff] %v1768
  %1793 = vst [vmem:[#allocation4 + $0xa0] sm:$0xff] %v1769
  %1794 = vst [vmem:[#allocation4 + $0xa8] sm:$0xff] %v1770
  %1795 = vst [vmem:[#allocation4 + $0xc0] sm:$0xff] %v1771
  %1796 = vst [vmem:[#allocation4 + $0xc8] sm:$0xff] %v1772
  %1797 = vst [vmem:[#allocation4 + $0xe0] sm:$0xff] %v1773
  %1798 = vst [vmem:[#allocation4 + $0xe8] sm:$0xff] %v1774
  %1799 = vst [vmem:[#allocation4 + $0x100] sm:$0xff] %v1775
  %1800 = vst [vmem:[#allocation4 + $0x108] sm:$0xff] %v1776
  %1801 = vst [vmem:[#allocation4 + $0x120] sm:$0xff] %v1777
  %1802 = vst [vmem:[#allocation4 + $0x128] sm:$0xff] %v1778
  %1803 = vst [vmem:[#allocation4 + $0x140] sm:$0xff] %v1779
  %1804 = vst [vmem:[#allocation4 + $0x148] sm:$0xff] %v1780
  %1805 = vst [vmem:[#allocation4 + $0x160] sm:$0xff] %v1781
  %1806 = vst [vmem:[#allocation4 + $0x168] sm:$0xff] %v1782
  %v1807 = vld [vmem:[#allocation4 + $0x10] sm:$0xff]
  %v1808 = vld [vmem:[#allocation4 + $0x18] sm:$0xff]
  %v1809 = vld [vmem:[#allocation4 + $0x30] sm:$0xff]
  %v1810 = vld [vmem:[#allocation4 + $0x38] sm:$0xff]
  %v1811 = vld [vmem:[#allocation4 + $0x50] sm:$0xff]
  %v1812 = vld [vmem:[#allocation4 + $0x58] sm:$0xff]
  %v1813 = vld [vmem:[#allocation4 + $0x70] sm:$0xff]
  %v1814 = vld [vmem:[#allocation4 + $0x78] sm:$0xff]
  %v1815 = vld [vmem:[#allocation4 + $0x90] sm:$0xff]
  %v1816 = vld [vmem:[#allocation4 + $0x98] sm:$0xff]
  %v1817 = vld [vmem:[#allocation4 + $0xb0] sm:$0xff]
  %v1818 = vld [vmem:[#allocation4 + $0xb8] sm:$0xff]
  %v1819 = vld [vmem:[#allocation4 + $0xd0] sm:$0xff]
  %v1820 = vld [vmem:[#allocation4 + $0xd8] sm:$0xff]
  %v1821 = vld [vmem:[#allocation4 + $0xf0] sm:$0xff]
  %v1822 = vld [vmem:[#allocation4 + $0xf8] sm:$0xff]
  %v1823 = vld [vmem:[#allocation4 + $0x110] sm:$0xff]
  %v1824 = vld [vmem:[#allocation4 + $0x118] sm:$0xff]
  %v1825 = vld [vmem:[#allocation4 + $0x130] sm:$0xff]
  %v1826 = vld [vmem:[#allocation4 + $0x138] sm:$0xff]
  %v1827 = vld [vmem:[#allocation4 + $0x150] sm:$0xff]
  %v1828 = vld [vmem:[#allocation4 + $0x158] sm:$0xff]
  %v1829 = vld [vmem:[#allocation4 + $0x170] sm:$0xff]
  %v1830 = vld [vmem:[#allocation4 + $0x178] sm:$0xff]
  %v1831 = vmul.f32 %v1807, %v1712
  %v1832 = vmul.f32 %v1808, %v1712
  %v1833 = vmul.f32 %v1809, %v1714
  %v1834 = vmul.f32 %v1810, %v1714
  %v1835 = vmul.f32 %v1811, %v1716
  %v1836 = vmul.f32 %v1812, %v1716
  %v1837 = vmul.f32 %v1813, %v1718
  %v1838 = vmul.f32 %v1814, %v1718
  %v1839 = vmul.f32 %v1815, %v1720
  %v1840 = vmul.f32 %v1816, %v1720
  %v1841 = vmul.f32 %v1817, %v1722
  %v1842 = vmul.f32 %v1818, %v1722
  %v1843 = vmul.f32 %v1819, %v1724
  %v1844 = vmul.f32 %v1820, %v1724
  %v1845 = vmul.f32 %v1821, %v1726
  %v1846 = vmul.f32 %v1822, %v1726
  %v1847 = vmul.f32 %v1823, %v1728
  %v1848 = vmul.f32 %v1824, %v1728
  %v1849 = vmul.f32 %v1825, %v1730
  %v1850 = vmul.f32 %v1826, %v1730
  %v1851 = vmul.f32 %v1827, %v1732
  %v1852 = vmul.f32 %v1828, %v1732
  %v1853 = vmul.f32 %v1829, %v1734
  %v1854 = vmul.f32 %v1830, %v1734
  %1855 = vst [vmem:[#allocation4 + $0x10] sm:$0xff] %v1831
  %1856 = vst [vmem:[#allocation4 + $0x18] sm:$0xff] %v1832
  %1857 = vst [vmem:[#allocation4 + $0x30] sm:$0xff] %v1833
  %1858 = vst [vmem:[#allocation4 + $0x38] sm:$0xff] %v1834
  %1859 = vst [vmem:[#allocation4 + $0x50] sm:$0xff] %v1835
  %1860 = vst [vmem:[#allocation4 + $0x58] sm:$0xff] %v1836
  %1861 = vst [vmem:[#allocation4 + $0x70] sm:$0xff] %v1837
  %1862 = vst [vmem:[#allocation4 + $0x78] sm:$0xff] %v1838
  %1863 = vst [vmem:[#allocation4 + $0x90] sm:$0xff] %v1839
  %1864 = vst [vmem:[#allocation4 + $0x98] sm:$0xff] %v1840
  %1865 = vst [vmem:[#allocation4 + $0xb0] sm:$0xff] %v1841
  %1866 = vst [vmem:[#allocation4 + $0xb8] sm:$0xff] %v1842
  %1867 = vst [vmem:[#allocation4 + $0xd0] sm:$0xff] %v1843
  %1868 = vst [vmem:[#allocation4 + $0xd8] sm:$0xff] %v1844
  %1869 = vst [vmem:[#allocation4 + $0xf0] sm:$0xff] %v1845
  %1870 = vst [vmem:[#allocation4 + $0xf8] sm:$0xff] %v1846
  %1871 = vst [vmem:[#allocation4 + $0x110] sm:$0xff] %v1847
  %1872 = vst [vmem:[#allocation4 + $0x118] sm:$0xff] %v1848
  %1873 = vst [vmem:[#allocation4 + $0x130] sm:$0xff] %v1849
  %1874 = vst [vmem:[#allocation4 + $0x138] sm:$0xff] %v1850
  %1875 = vst [vmem:[#allocation4 + $0x150] sm:$0xff] %v1851
  %1876 = vst [vmem:[#allocation4 + $0x158] sm:$0xff] %v1852
  %1877 = vst [vmem:[#allocation4 + $0x170] sm:$0xff] %v1853
  %1878 = vst [vmem:[#allocation4 + $0x178] sm:$0xff] %v1854
  %v1879 = vld [vmem:[%s3 + $0xc0] sm:$0xff]
  %v1880 = vld [vmem:[%s3 + $0xd0] sm:$0x1]
  %v1881 = vld [vmem:[#allocation4] sm:$0xff]
  %v1882 = vld [vmem:[#allocation4 + $0x8] sm:$0xff]
  %v1883 = vld [vmem:[#allocation4 + $0x10] sm:$0xff]
  %v1884 = vld [vmem:[#allocation4 + $0x18] sm:$0xff]
  %v1885 = vld [vmem:[#allocation4 + $0x20] sm:$0xff]
  %v1886 = vld [vmem:[#allocation4 + $0x28] sm:$0xff]
  %v1887 = vld [vmem:[#allocation4 + $0x30] sm:$0xff]
  %v1888 = vld [vmem:[#allocation4 + $0x38] sm:$0xff]
  %v1889 = vld [vmem:[#allocation4 + $0x40] sm:$0xff]
  %v1890 = vld [vmem:[#allocation4 + $0x48] sm:$0xff]
  %v1891 = vld [vmem:[#allocation4 + $0x50] sm:$0xff]
  %v1892 = vld [vmem:[#allocation4 + $0x58] sm:$0xff]
  %v1893 = vld [vmem:[#allocation4 + $0x60] sm:$0xff]
  %v1894 = vld [vmem:[#allocation4 + $0x68] sm:$0xff]
  %v1895 = vld [vmem:[#allocation4 + $0x70] sm:$0xff]
  %v1896 = vld [vmem:[#allocation4 + $0x78] sm:$0xff]
  %v1897 = vld [vmem:[#allocation4 + $0x80] sm:$0xff]
  %v1898 = vld [vmem:[#allocation4 + $0x88] sm:$0xff]
  %v1899 = vld [vmem:[#allocation4 + $0x90] sm:$0xff]
  %v1900 = vld [vmem:[#allocation4 + $0x98] sm:$0xff]
  %v1901 = vld [vmem:[#allocation4 + $0xa0] sm:$0xff]
  %v1902 = vld [vmem:[#allocation4 + $0xa8] sm:$0xff]
  %v1903 = vld [vmem:[#allocation4 + $0xb0] sm:$0xff]
  %v1904 = vld [vmem:[#allocation4 + $0xb8] sm:$0xff]
  %v1905 = vld [vmem:[#allocation4 + $0xc0] sm:$0xff]
  %v1906 = vld [vmem:[#allocation4 + $0xc8] sm:$0xff]
  %v1907 = vld [vmem:[#allocation4 + $0xd0] sm:$0xff]
  %v1908 = vld [vmem:[#allocation4 + $0xd8] sm:$0xff]
  %v1909 = vld [vmem:[#allocation4 + $0xe0] sm:$0xff]
  %v1910 = vld [vmem:[#allocation4 + $0xe8] sm:$0xff]
  %v1911 = vld [vmem:[#allocation4 + $0xf0] sm:$0xff]
  %v1912 = vld [vmem:[#allocation4 + $0xf8] sm:$0xff]
  %v1913 = vld [vmem:[#allocation4 + $0x100] sm:$0xff]
  %v1914 = vld [vmem:[#allocation4 + $0x108] sm:$0xff]
  %v1915 = vld [vmem:[#allocation4 + $0x110] sm:$0xff]
  %v1916 = vld [vmem:[#allocation4 + $0x118] sm:$0xff]
  %v1917 = vld [vmem:[#allocation4 + $0x120] sm:$0xff]
  %v1918 = vld [vmem:[#allocation4 + $0x128] sm:$0xff]
  %v1919 = vld [vmem:[#allocation4 + $0x130] sm:$0xff]
  %v1920 = vld [vmem:[#allocation4 + $0x138] sm:$0xff]
  %v1921 = vld [vmem:[#allocation4 + $0x140] sm:$0xff]
  %v1922 = vld [vmem:[#allocation4 + $0x148] sm:$0xff]
  %v1923 = vld [vmem:[#allocation4 + $0x150] sm:$0xff]
  %v1924 = vld [vmem:[#allocation4 + $0x158] sm:$0xff]
  %v1925 = vld [vmem:[#allocation4 + $0x160] sm:$0xff]
  %v1926 = vld [vmem:[#allocation4 + $0x168] sm:$0xff]
  %v1927 = vld [vmem:[#allocation4 + $0x170] sm:$0xff]
  %v1928 = vld [vmem:[#allocation4 + $0x178] sm:$0xff]
  %1930 = vset.pattern.permute.xlu0 96
  %1931 = vperm.xlu0 %1930, %v1879
  %v1932 = vpop.permute.xlu0 %1931
  %1935 = vset.pattern.permute.xlu0 96
  %1936 = vperm.xlu0 %1935, %v1880
  %v1937 = vpop.permute.xlu0 %1936
  %vm1939 = vcmask 785408
  %v1940 = vsel %vm1939, %v1879, 0
  %v1942 = vsel %vm1939, %v1880, 0
  %1944 = vmatprep.subr.mxu0 0.0
  %1945 = vmatpush1.msra.mxu0 0.0
  %1946 = vmatprep.subr.mxu0 0.0
  %1947 = vmatpush1.msra.mxu0 0.0
  %1948 = vmatprep.subr.mxu0 0.0
  %1949 = vmatpush1.msra.mxu0 0.0
  %1950 = vmatprep.subr.mxu0 0.0
  %1951 = vmatpush1.msra.mxu0 0.0
  %1952 = vmatprep.subr.mxu0 %v1926
  %1953 = vmatpush1.msra.mxu0 %v1925
  %1954 = vmatprep.subr.mxu0 %v1922
  %1955 = vmatpush1.msra.mxu0 %v1921
  %1956 = vmatprep.subr.mxu0 %v1918
  %1957 = vmatpush1.msra.mxu0 %v1917
  %1958 = vmatprep.subr.mxu0 %v1914
  %1959 = vmatpush1.msra.mxu0 %v1913
  %1960 = vmatprep.subr.mxu0 %v1910
  %1961 = vmatpush1.msra.mxu0 %v1909
  %1962 = vmatprep.subr.mxu0 %v1906
  %1963 = vmatpush1.msra.mxu0 %v1905
  %1964 = vmatprep.subr.mxu0 %v1902
  %1965 = vmatpush1.msra.mxu0 %v1901
  %1966 = vmatprep.subr.mxu0 %v1898
  %1967 = vmatpush1.msra.mxu0 %v1897
  %1968 = vmatprep.subr.mxu0 %v1894
  %1969 = vmatpush1.msra.mxu0 %v1893
  %1970 = vmatprep.subr.mxu0 %v1890
  %1971 = vmatpush1.msra.mxu0 %v1889
  %1972 = vmatprep.subr.mxu0 %v1886
  %1973 = vmatpush1.msra.mxu0 %v1885
  %1974 = vmatprep.subr.mxu0 %v1882
  %1975 = vmatpush1.msra.mxu0 %v1881
  %1976 = vmatprep.subr.mxu0 0.0
  %1977 = vmatpush2.msra.mxu0 0.0
  %1978 = vmatprep.subr.mxu0 0.0
  %1979 = vmatpush2.msra.mxu0 0.0
  %1980 = vmatprep.subr.mxu0 0.0
  %1981 = vmatpush2.msra.mxu0 0.0
  %1982 = vmatprep.subr.mxu0 0.0
  %1983 = vmatpush2.msra.mxu0 0.0
  %1984 = vmatprep.subr.mxu0 0.0
  %1985 = vmatpush2.msra.mxu0 0.0
  %1986 = vmatprep.subr.mxu0 0.0
  %1987 = vmatpush2.msra.mxu0 0.0
  %1988 = vmatprep.subr.mxu0 0.0
  %1989 = vmatpush2.msra.mxu0 0.0
  %1990 = vmatprep.subr.mxu0 0.0
  %1991 = vmatpush2.msra.mxu0 0.0
  %1992 = vmatprep.subr.mxu0 0.0
  %1993 = vmatpush2.msra.mxu0 0.0
  %1994 = vmatprep.subr.mxu0 0.0
  %1995 = vmatpush2.msra.mxu0 0.0
  %1996 = vmatprep.subr.mxu0 0.0
  %1997 = vmatpush2.msra.mxu0 0.0
  %1998 = vmatprep.subr.mxu0 0.0
  %1999 = vmatpush2.msra.mxu0 0.0
  %2000 = vmatprep.subr.mxu0 0.0
  %2001 = vmatpush2.msra.mxu0 0.0
  %2002 = vmatprep.subr.mxu0 0.0
  %2003 = vmatpush2.msra.mxu0 0.0
  %2004 = vmatprep.subr.mxu0 0.0
  %2005 = vmatpush2.msra.mxu0 0.0
  %2006 = vmatprep.subr.mxu0 0.0
  %2007 = vmatpush2.msra.mxu0 0.0
  %2008 = vmatprep.mubr.f32.mxu0 0.0
  %2009 = vmatmul.mubr.f32.gmra.mxu0 %v1940
  %v2010 = vpop.f32.mrf.mxu0
  %v2011 = vadd.f32 %v1932, %v2010
  %v2012 = vpop.f32.mrf.mxu0
  %v2013 = vadd.f32 %v1932, %v2012
  %2014 = vmatprep.mubr.f32.mxu0 0.0
  %2015 = vmatmul.mubr.f32.gmra.mxu0 %v1942
  %v2016 = vpop.f32.mrf.mxu0
  %v2017 = vadd.f32 %v1937, %v2016
  %v2018 = vpop.f32.mrf.mxu0
  %v2019 = vadd.f32 %v1937, %v2018
  %2020 = vdwg.mxu0
  %2021 = vmatprep.subr.mxu0 0.0
  %2022 = vmatpush1.msra.mxu0 0.0
  %2023 = vmatprep.subr.mxu0 0.0
  %2024 = vmatpush1.msra.mxu0 0.0
  %2025 = vmatprep.subr.mxu0 0.0
  %2026 = vmatpush1.msra.mxu0 0.0
  %2027 = vmatprep.subr.mxu0 0.0
  %2028 = vmatpush1.msra.mxu0 0.0
  %2029 = vmatprep.subr.mxu0 %v1928
  %2030 = vmatpush1.msra.mxu0 %v1927
  %2031 = vmatprep.subr.mxu0 %v1924
  %2032 = vmatpush1.msra.mxu0 %v1923
  %2033 = vmatprep.subr.mxu0 %v1920
  %2034 = vmatpush1.msra.mxu0 %v1919
  %2035 = vmatprep.subr.mxu0 %v1916
  %2036 = vmatpush1.msra.mxu0 %v1915
  %2037 = vmatprep.subr.mxu0 %v1912
  %2038 = vmatpush1.msra.mxu0 %v1911
  %2039 = vmatprep.subr.mxu0 %v1908
  %2040 = vmatpush1.msra.mxu0 %v1907
  %2041 = vmatprep.subr.mxu0 %v1904
  %2042 = vmatpush1.msra.mxu0 %v1903
  %2043 = vmatprep.subr.mxu0 %v1900
  %2044 = vmatpush1.msra.mxu0 %v1899
  %2045 = vmatprep.subr.mxu0 %v1896
  %2046 = vmatpush1.msra.mxu0 %v1895
  %2047 = vmatprep.subr.mxu0 %v1892
  %2048 = vmatpush1.msra.mxu0 %v1891
  %2049 = vmatprep.subr.mxu0 %v1888
  %2050 = vmatpush1.msra.mxu0 %v1887
  %2051 = vmatprep.subr.mxu0 %v1884
  %2052 = vmatpush1.msra.mxu0 %v1883
  %2053 = vmatprep.subr.mxu0 0.0
  %2054 = vmatpush2.msra.mxu0 0.0
  %2055 = vmatprep.subr.mxu0 0.0
  %2056 = vmatpush2.msra.mxu0 0.0
  %2057 = vmatprep.subr.mxu0 0.0
  %2058 = vmatpush2.msra.mxu0 0.0
  %2059 = vmatprep.subr.mxu0 0.0
  %2060 = vmatpush2.msra.mxu0 0.0
  %2061 = vmatprep.subr.mxu0 0.0
  %2062 = vmatpush2.msra.mxu0 0.0
  %2063 = vmatprep.subr.mxu0 0.0
  %2064 = vmatpush2.msra.mxu0 0.0
  %2065 = vmatprep.subr.mxu0 0.0
  %2066 = vmatpush2.msra.mxu0 0.0
  %2067 = vmatprep.subr.mxu0 0.0
  %2068 = vmatpush2.msra.mxu0 0.0
  %2069 = vmatprep.subr.mxu0 0.0
  %2070 = vmatpush2.msra.mxu0 0.0
  %2071 = vmatprep.subr.mxu0 0.0
  %2072 = vmatpush2.msra.mxu0 0.0
  %2073 = vmatprep.subr.mxu0 0.0
  %2074 = vmatpush2.msra.mxu0 0.0
  %2075 = vmatprep.subr.mxu0 0.0
  %2076 = vmatpush2.msra.mxu0 0.0
  %2077 = vmatprep.subr.mxu0 0.0
  %2078 = vmatpush2.msra.mxu0 0.0
  %2079 = vmatprep.subr.mxu0 0.0
  %2080 = vmatpush2.msra.mxu0 0.0
  %2081 = vmatprep.subr.mxu0 0.0
  %2082 = vmatpush2.msra.mxu0 0.0
  %2083 = vmatprep.subr.mxu0 0.0
  %2084 = vmatpush2.msra.mxu0 0.0
  %2085 = vmatprep.mubr.f32.mxu0 0.0
  %2086 = vmatmul.mubr.f32.gmra.mxu0 %v1940
  %v2087 = vpop.f32.mrf.mxu0
  %v2088 = vadd.f32 %v1932, %v2087
  %v2089 = vpop.f32.mrf.mxu0
  %v2090 = vadd.f32 %v1932, %v2089
  %2091 = vmatprep.mubr.f32.mxu0 0.0
  %2092 = vmatmul.mubr.f32.gmra.mxu0 %v1942
  %v2093 = vpop.f32.mrf.mxu0
  %v2094 = vadd.f32 %v1937, %v2093
  %v2095 = vpop.f32.mrf.mxu0
  %v2096 = vadd.f32 %v1937, %v2095
  %2097 = vdwg.mxu0
  %v2102 = vrot.slane %v2011, 3
  %v2103 = vrot.slane %v2013, 3
  %v2104 = vrot.slane %v2088, 3
  %v2105 = vrot.slane %v2090, 3
  %v2110 = vmax.f32 %v2011, %v2102
  %v2111 = vmax.f32 %v2013, %v2103
  %v2112 = vmax.f32 %v2088, %v2104
  %v2113 = vmax.f32 %v2090, %v2105
  %vm2118 = vcmask 1041408
  %v2119 = vrot.slane %v2011, 6
  %v2120 = vrot.slane %v2017, 6
  %v2121 = vsel %vm2118, %v2119, %v2120
  %v2122 = vrot.slane %v2013, 6
  %v2123 = vrot.slane %v2019, 6
  %v2124 = vsel %vm2118, %v2122, %v2123
  %v2125 = vrot.slane %v2088, 6
  %v2126 = vrot.slane %v2094, 6
  %v2127 = vsel %vm2118, %v2125, %v2126
  %v2128 = vrot.slane %v2090, 6
  %v2129 = vrot.slane %v2096, 6
  %v2130 = vsel %vm2118, %v2128, %v2129
  %v2135 = vmax.f32 %v2110, %v2121
  %v2136 = vmax.f32 %v2111, %v2124
  %v2137 = vmax.f32 %v2112, %v2127
  %v2138 = vmax.f32 %v2113, %v2130
  %v2139 = vsub.f32 %v2011, %v2135
  %v2140 = vsub.f32 %v2013, %v2136
  %v2141 = vsub.f32 %v2088, %v2137
  %v2142 = vsub.f32 %v2090, %v2138
  %v2143 = vmul.f32 %v2139, 1.442695
  %v2144 = vpow.pop %v2143
  %v2145 = vmul.f32 %v2140, 1.442695
  %v2146 = vpow.pop %v2145
  %v2147 = vmul.f32 %v2141, 1.442695
  %v2148 = vpow.pop %v2147
  %v2149 = vmul.f32 %v2142, 1.442695
  %v2150 = vpow.pop %v2149
  %v2155 = vrot.slane %v2135, 5
  %v2156 = vrot.slane %v2136, 5
  %v2157 = vrot.slane %v2137, 5
  %v2158 = vrot.slane %v2138, 5
  %v2163 = vsub.f32 %v2011, %v2155
  %v2164 = vsub.f32 %v2013, %v2156
  %v2165 = vsub.f32 %v2088, %v2157
  %v2166 = vsub.f32 %v2090, %v2158
  %v2167 = vmul.f32 %v2163, 1.442695
  %v2168 = vpow.pop %v2167
  %v2169 = vmul.f32 %v2164, 1.442695
  %v2170 = vpow.pop %v2169
  %v2171 = vmul.f32 %v2165, 1.442695
  %v2172 = vpow.pop %v2171
  %v2173 = vmul.f32 %v2166, 1.442695
  %v2174 = vpow.pop %v2173
  %v2175 = vrot.slane %v2135, 2
  %v2176 = vrot.slane %v2136, 2
  %v2177 = vrot.slane %v2137, 2
  %v2178 = vrot.slane %v2138, 2
  %v2183 = vsub.f32 %v2011, %v2175
  %v2184 = vsub.f32 %v2013, %v2176
  %v2185 = vsub.f32 %v2088, %v2177
  %v2186 = vsub.f32 %v2090, %v2178
  %v2187 = vsub.f32 %v2017, %v2175
  %v2188 = vsub.f32 %v2019, %v2176
  %v2189 = vsub.f32 %v2094, %v2177
  %v2190 = vsub.f32 %v2096, %v2178
  %v2191 = vmul.f32 %v2183, 1.442695
  %v2192 = vpow.pop %v2191
  %v2193 = vmul.f32 %v2184, 1.442695
  %v2194 = vpow.pop %v2193
  %v2195 = vmul.f32 %v2185, 1.442695
  %v2196 = vpow.pop %v2195
  %v2197 = vmul.f32 %v2186, 1.442695
  %v2198 = vpow.pop %v2197
  %v2199 = vmul.f32 %v2187, 1.442695
  %v2200 = vpow.pop %v2199
  %v2201 = vmul.f32 %v2188, 1.442695
  %v2202 = vpow.pop %v2201
  %v2203 = vmul.f32 %v2189, 1.442695
  %v2204 = vpow.pop %v2203
  %v2205 = vmul.f32 %v2190, 1.442695
  %v2206 = vpow.pop %v2205
  %v2211 = vrot.slane %v2168, 3
  %v2212 = vrot.slane %v2170, 3
  %v2213 = vrot.slane %v2172, 3
  %v2214 = vrot.slane %v2174, 3
  %v2219 = vadd.f32 %v2144, %v2211
  %v2220 = vadd.f32 %v2146, %v2212
  %v2221 = vadd.f32 %v2148, %v2213
  %v2222 = vadd.f32 %v2150, %v2214
  %v2231 = vrot.slane %v2192, 6
  %v2232 = vrot.slane %v2200, 6
  %v2233 = vsel %vm2118, %v2231, %v2232
  %v2234 = vrot.slane %v2194, 6
  %v2235 = vrot.slane %v2202, 6
  %v2236 = vsel %vm2118, %v2234, %v2235
  %v2237 = vrot.slane %v2196, 6
  %v2238 = vrot.slane %v2204, 6
  %v2239 = vsel %vm2118, %v2237, %v2238
  %v2240 = vrot.slane %v2198, 6
  %v2241 = vrot.slane %v2206, 6
  %v2242 = vsel %vm2118, %v2240, %v2241
  %v2247 = vadd.f32 %v2219, %v2233
  %v2248 = vadd.f32 %v2220, %v2236
  %v2249 = vadd.f32 %v2221, %v2239
  %v2250 = vadd.f32 %v2222, %v2242
  %v2251 = vld [vmem:[#allocation2] sm:$0x7]
  %v2252 = vld [vmem:[#allocation2 + $0x8] sm:$0x7]
  %v2253 = vld [vmem:[#allocation2 + $0x10] sm:$0x7]
  %v2254 = vld [vmem:[#allocation2 + $0x18] sm:$0x7]
  %v2255 = vld [vmem:[#allocation2] sm:$0x38]
  %v2256 = vld [vmem:[#allocation2 + $0x8] sm:$0x38]
  %v2257 = vld [vmem:[#allocation2 + $0x10] sm:$0x38]
  %v2258 = vld [vmem:[#allocation2 + $0x18] sm:$0x38]
  %v2259 = vld [vmem:[#allocation2 + $0x20] sm:$0x7]
  %v2260 = vld [vmem:[#allocation2 + $0x28] sm:$0x7]
  %v2261 = vld [vmem:[#allocation2 + $0x30] sm:$0x7]
  %v2262 = vld [vmem:[#allocation2 + $0x38] sm:$0x7]
  %v2263 = vmul.f32 %v2251, %v2144
  %v2264 = vmul.f32 %v2252, %v2146
  %v2265 = vmul.f32 %v2253, %v2148
  %v2266 = vmul.f32 %v2254, %v2150
  %v2267 = vmul.f32 %v2255, %v2168
  %v2268 = vmul.f32 %v2256, %v2170
  %v2269 = vmul.f32 %v2257, %v2172
  %v2270 = vmul.f32 %v2258, %v2174
  %v2275 = vrot.slane %v2267, 3
  %v2276 = vrot.slane %v2268, 3
  %v2277 = vrot.slane %v2269, 3
  %v2278 = vrot.slane %v2270, 3
  %v2283 = vadd.f32 %v2263, %v2275
  %v2284 = vadd.f32 %v2264, %v2276
  %v2285 = vadd.f32 %v2265, %v2277
  %v2286 = vadd.f32 %v2266, %v2278
  %v2287 = vmul.f32 %v2259, %v2233
  %v2288 = vmul.f32 %v2260, %v2236
  %v2289 = vmul.f32 %v2261, %v2239
  %v2290 = vmul.f32 %v2262, %v2242
  %v2291 = vadd.f32 %v2283, %v2287
  %v2292 = vadd.f32 %v2284, %v2288
  %v2293 = vadd.f32 %v2285, %v2289
  %v2294 = vadd.f32 %v2286, %v2290
  %v2295 = vrcp.pop %v2247
  %v2296 = vmul.f32 %v2291, %v2295
  %v2297 = vrcp.pop %v2248
  %v2298 = vmul.f32 %v2292, %v2297
  %v2299 = vrcp.pop %v2249
  %v2300 = vmul.f32 %v2293, %v2299
  %v2301 = vrcp.pop %v2250
  %v2302 = vmul.f32 %v2294, %v2301
  %v2305 = vcombine.low %v2296, %v2298
  %2307 = vst [vmem:[%s4] sm:$0x77] %v2305
  %v2310 = vcombine.low %v2300, %v2302
  %s2312 = scalar_lea.vmem %s4, 8
  %2313 = vst [vmem:[%s2312] sm:$0x77] %v2310
  // Predicated region
  $region18: #{_compositor_call.1} parent=0 // pred_check
    _
  $region19: #{_compositor_call.1} parent=0 // pred_check_branch
    %2315 = sbr.rel (0) target = $region21
  $region20: #{_compositor_call.1} parent=0 // pred_region
    _
  $region21: #{_compositor_call.1} parent=0 // pred_fallthru
    _
  // Predicated region
  $region22: #{_compositor_call.1} parent=0 // pred_check
    _
  $region23: #{_compositor_call.1} parent=0 // pred_check_branch
    %2317 = sbr.rel (0) target = $region25
  $region24: #{_compositor_call.1} parent=0 // pred_region
    _
  $region25: #{_compositor_call.1} parent=0 // pred_fallthru
    _

</llo_original>
